<compile_context>
chip_gen: v6e
topology: v6e:2x2x1
jax: 0.10.0
libtpu: 0.0.40
codegen_flags: <defaults>
</compile_context>

<pallas_src>
from functools import partial

import jax
import jax.numpy as jnp
from jax.experimental import pallas as pl
from jax.experimental.pallas import tpu as pltpu


def _encoder_kernel(w_ref, x_ref, o_ref, *, K, PK, Wp, L):
    # w_ref: (K*K, Cout, Cin+1)  per-tap weights; column Cin of tap 0 holds bias
    # x_ref: (Cin+1, Lpad)       zero-padded input, flat over (n, h, w); row Cin = 1.0
    # o_ref: (Cout, L)           conv(+bias) -> 2x2 max-pool -> tanh over the padded
    #                            flat grid; wrapper picks the valid pool anchors.
    Lz = L + (PK - 1) * (Wp + 1)          # conv width so pooling slices keep width L

    # Conv as K*K shifted matmuls accumulated in f32 (contraction = Cin+1, bias rides).
    z = None
    for kh in range(K):
        for kw in range(K):
            d = kh * Wp + kw              # flat shift of tap (kh, kw)
            xs = x_ref[:, d:d + Lz]       # (Cin+1, Lz) static lane slice
            part = jnp.dot(w_ref[kh * K + kw], xs,
                           preferred_element_type=jnp.float32)
            z = part if z is None else z + part

    # PKxPK max-pool before tanh (tanh monotone; bias is per-channel constant,
    # already folded into z, so pooling first is exact).
    Wh = L + PK - 1
    zh = z[:, :Wh]
    for ph in range(1, PK):
        zh = jnp.maximum(zh, z[:, ph * Wp: ph * Wp + Wh])
    zp = zh[:, :L]
    for pw in range(1, PK):
        zp = jnp.maximum(zp, zh[:, pw: pw + L])

    o_ref[...] = jnp.tanh(zp).astype(o_ref.dtype)


@partial(jax.jit, static_argnames=("pool_k", "compute_dtype"))
def encoder_forward(x_nchw, weight_oihw, bias, pool_k, compute_dtype=jnp.bfloat16):
    """Encoder forward. x: (N, Cin, H, W) -> (N, Cout, Ho, Wo), Ho = Hconv // pool_k."""
    N, Cin, H, W = x_nchw.shape
    Cout, _, K, _ = weight_oihw.shape     # square conv kernel (kernel_size[0])
    pad = K // 2
    PK = pool_k
    Hp, Wp = H + 2 * pad, W + 2 * pad     # padded image
    Hc, Wc = Hp - K + 1, Wp - K + 1       # conv output size ('same' for odd K)
    Ho, Wo = Hc // PK, Wc // PK           # MaxPool2d floor mode, stride == kernel
    L = N * Hp * Wp                       # flat padded grid (lane axis)
    Lz = L + (PK - 1) * (Wp + 1)          # conv compute width inside the kernel
    max_d = (K - 1) * (Wp + 1)            # largest tap shift
    Lpad = ((max_d + Lz + 127) // 128) * 128   # lane-multiple input width (no OOB)

    # ---- layout plumbing only (fused by XLA under this jit; no im2col) ----
    # weights: (Cout,Cin,K,K) -> (K*K, Cout, Cin) + bias column on tap 0
    w_taps = jnp.transpose(weight_oihw, (2, 3, 0, 1)).reshape(K * K, Cout, Cin)
    b_col = jnp.zeros((K * K, Cout, 1), w_taps.dtype).at[0].set(bias[:, None])
    w_aug = jnp.concatenate([w_taps, b_col], axis=2).astype(compute_dtype)

    # input: (N,Cin,H,W) -> zero-padded channels-first flat (Cin, Lpad) + ones row
    x_cf = jnp.transpose(x_nchw, (1, 0, 2, 3))
    x_p = jnp.pad(x_cf, ((0, 0), (0, 0), (pad, pad), (pad, pad)))
    x_flat = jnp.pad(x_p.reshape(Cin, L), ((0, 0), (0, Lpad - L)))
    x_aug = jnp.concatenate(
        [x_flat, jnp.ones((1, Lpad), x_flat.dtype)], axis=0).astype(compute_dtype)

    kernel = partial(_encoder_kernel, K=K, PK=PK, Wp=Wp, L=L)

    # TODO(synk): for large images, tile the flat L axis over a grid dimension
    # marked "parallel" (Lt a multiple of 128 plus a (K-1+PK-1)*(Wp+1) halo in
    # the index_map), sized for v7x's 64 MiB VMEM (~half a v6e/v5e tile), and
    # let BlockSpec double-buffering overlap DMA with compute; at grid=(1,)
    # there is nothing to pipeline so the default buffering is left alone.
    out = pl.pallas_call(
        kernel,
        out_shape=jax.ShapeDtypeStruct((Cout, L), jnp.float32),
        grid=(1,),   # whole (tiny) problem in one step; batch lives on the lane axis
        in_specs=[
            pl.BlockSpec((K * K, Cout, Cin + 1), lambda i: (0, 0, 0)),
            pl.BlockSpec((Cin + 1, Lpad), lambda i: (0, 0)),
        ],
        out_specs=pl.BlockSpec((Cout, L), lambda i: (0, 0)),
        compiler_params=pltpu.CompilerParams(
            dimension_semantics=("arbitrary",),
        ),
    )(w_aug, x_aug)

    # Pick the valid pool anchors (stride-PK rows/cols of the padded grid) and go
    # to NCHW: one fused slice+transpose on ~Cout*L*4 bytes.
    y = out.reshape(Cout, N, Hp, Wp)[:, :, :PK * Ho:PK, :PK * Wo:PK]
    return jnp.transpose(y, (1, 0, 2, 3)).astype(x_nchw.dtype)


def encoder_reference(x_nchw, weight_oihw, bias, pool_k):
    """Pure-JAX reference matching the PyTorch module semantics (f32)."""
    K = weight_oihw.shape[2]
    pad = K // 2
    y = jax.lax.conv_general_dilated(
        x_nchw, weight_oihw,
        window_strides=(1, 1),
        padding=[(pad, pad), (pad, pad)],
        dimension_numbers=("NCHW", "OIHW", "NCHW"),
    )
    y = jnp.tanh(y + bias[None, :, None, None])
    return jax.lax.reduce_window(
        y, -jnp.inf, jax.lax.max,
        window_dimensions=(1, 1, pool_k, pool_k),
        window_strides=(1, 1, pool_k, pool_k),
        padding="VALID",
    )


if __name__ == "__main__":
    # Module config: Encoder(depth_in=4, depth_out=8, kernel_size=(3, 2))
    #   kernel_size[0] = 3 -> 3x3 conv, pad=1;  kernel_size[1] = 2 -> 2x2 max-pool
    N, Cin, Cout, H, W = 2, 4, 8, 16, 16
    K, pool_k = 3, 2

    key = jax.random.PRNGKey(0)
    kx, kw, kb = jax.random.split(key, 3)

    x = jax.random.normal(kx, (N, Cin, H, W), dtype=jnp.float32)

    # Deterministic parameter init mirroring the module's __init__:
    #   conv.weight ~ xavier_normal_, conv.bias ~ default Conv2d uniform init
    fan_in = Cin * K * K
    fan_out = Cout * K * K
    xavier_std = (2.0 / (fan_in + fan_out)) ** 0.5
    weight = xavier_std * jax.random.normal(kw, (Cout, Cin, K, K), dtype=jnp.float32)
    bias_bound = 1.0 / (fan_in ** 0.5)
    bias = jax.random.uniform(kb, (Cout,), dtype=jnp.float32,
                              minval=-bias_bound, maxval=bias_bound)

    ref = jax.block_until_ready(encoder_reference(x, weight, bias, pool_k))

    # Strict check: f32 MXU operands reproduce the module to 1e-5.
    out_f32 = jax.block_until_ready(
        encoder_forward(x, weight, bias, pool_k, compute_dtype=jnp.float32))
    assert out_f32.shape == (N, Cout, H // pool_k, W // pool_k), out_f32.shape
    assert jnp.allclose(out_f32, ref, rtol=1e-5, atol=1e-5), \
        float(jnp.max(jnp.abs(out_f32 - ref)))

    # Default fast path: bf16 MXU operands, f32 accumulation/epilogue
    # (tolerance relaxed for bf16 operand rounding, per review).
    out_bf16 = jax.block_until_ready(encoder_forward(x, weight, bias, pool_k))
    assert out_bf16.shape == (N, Cout, H // pool_k, W // pool_k), out_bf16.shape
    assert jnp.allclose(out_bf16, ref, rtol=5e-2, atol=5e-2), \
        float(jnp.max(jnp.abs(out_bf16 - ref)))

    print("KERNEL_OK")
</pallas_src>

<mosaic_0001>
module attributes {stable_mosaic.version = 11 : i64} {
  func.func @_encoder_kernel(%arg0: i32, %arg1: memref<9x8x5xf32, #tpu.memory_space<vmem>>, %arg2: memref<5x768xf32, #tpu.memory_space<vmem>>, %arg3: memref<8x648xf32, #tpu.memory_space<vmem>>) attributes {dimension_semantics = [#tpu.dimension_semantics<arbitrary>], iteration_bounds = array<i64: 1>, scalar_prefetch = 0 : i64, scratch_operands = 0 : i64, tpu.core_type = #tpu.core_type<tc>, window_params = [{pipeline_mode = #tpu.pipeline_mode<synchronous>, transform_indices = @transform_0, window_bounds = array<i64: 9, 8, 5>}, {pipeline_mode = #tpu.pipeline_mode<synchronous>, transform_indices = @transform_1, window_bounds = array<i64: 5, 768>}, {pipeline_mode = #tpu.pipeline_mode<synchronous>, transform_indices = @transform_2, window_bounds = array<i64: 8, 648>}]} {
    %c0 = arith.constant 0 : index
    %c0_0 = arith.constant 0 : index
    %0 = vector.load %arg2[%c0, %c0_0] : memref<5x768xf32, #tpu.memory_space<vmem>>, vector<5x667xf32>
    %c0_1 = arith.constant 0 : index
    %c0_2 = arith.constant 0 : index
    %c0_3 = arith.constant 0 : index
    %1 = vector.load %arg1[%c0_1, %c0_2, %c0_3] : memref<9x8x5xf32, #tpu.memory_space<vmem>>, vector<1x8x5xf32>
    %2 = vector.shape_cast %1 : vector<1x8x5xf32> to vector<8x5xf32>
    %cst = arith.constant dense<0.000000e+00> : vector<8x667xf32>
    %3 = tpu.matmul %2, %0, %cst {dimension_numbers = #tpu.dot_dimension_numbers<[1], [0], [0], [1], [0, 0, 1, 1], [], []>} : vector<8x5xf32>, vector<5x667xf32>, vector<8x667xf32> -> vector<8x667xf32>
    %c0_4 = arith.constant 0 : index
    %c1 = arith.constant 1 : index
    %4 = vector.load %arg2[%c0_4, %c1] : memref<5x768xf32, #tpu.memory_space<vmem>>, vector<5x667xf32>
    %c1_5 = arith.constant 1 : index
    %c0_6 = arith.constant 0 : index
    %c0_7 = arith.constant 0 : index
    %5 = vector.load %arg1[%c1_5, %c0_6, %c0_7] : memref<9x8x5xf32, #tpu.memory_space<vmem>>, vector<1x8x5xf32>
    %6 = vector.shape_cast %5 : vector<1x8x5xf32> to vector<8x5xf32>
    %cst_8 = arith.constant dense<0.000000e+00> : vector<8x667xf32>
    %7 = tpu.matmul %6, %4, %cst_8 {dimension_numbers = #tpu.dot_dimension_numbers<[1], [0], [0], [1], [0, 0, 1, 1], [], []>} : vector<8x5xf32>, vector<5x667xf32>, vector<8x667xf32> -> vector<8x667xf32>
    %8 = arith.addf %3, %7 : vector<8x667xf32>
    %c0_9 = arith.constant 0 : index
    %c2 = arith.constant 2 : index
    %9 = vector.load %arg2[%c0_9, %c2] : memref<5x768xf32, #tpu.memory_space<vmem>>, vector<5x667xf32>
    %c2_10 = arith.constant 2 : index
    %c0_11 = arith.constant 0 : index
    %c0_12 = arith.constant 0 : index
    %10 = vector.load %arg1[%c2_10, %c0_11, %c0_12] : memref<9x8x5xf32, #tpu.memory_space<vmem>>, vector<1x8x5xf32>
    %11 = vector.shape_cast %10 : vector<1x8x5xf32> to vector<8x5xf32>
    %cst_13 = arith.constant dense<0.000000e+00> : vector<8x667xf32>
    %12 = tpu.matmul %11, %9, %cst_13 {dimension_numbers = #tpu.dot_dimension_numbers<[1], [0], [0], [1], [0, 0, 1, 1], [], []>} : vector<8x5xf32>, vector<5x667xf32>, vector<8x667xf32> -> vector<8x667xf32>
    %13 = arith.addf %8, %12 : vector<8x667xf32>
    %c0_14 = arith.constant 0 : index
    %c18 = arith.constant 18 : index
    %14 = vector.load %arg2[%c0_14, %c18] : memref<5x768xf32, #tpu.memory_space<vmem>>, vector<5x667xf32>
    %c3 = arith.constant 3 : index
    %c0_15 = arith.constant 0 : index
    %c0_16 = arith.constant 0 : index
    %15 = vector.load %arg1[%c3, %c0_15, %c0_16] : memref<9x8x5xf32, #tpu.memory_space<vmem>>, vector<1x8x5xf32>
    %16 = vector.shape_cast %15 : vector<1x8x5xf32> to vector<8x5xf32>
    %cst_17 = arith.constant dense<0.000000e+00> : vector<8x667xf32>
    %17 = tpu.matmul %16, %14, %cst_17 {dimension_numbers = #tpu.dot_dimension_numbers<[1], [0], [0], [1], [0, 0, 1, 1], [], []>} : vector<8x5xf32>, vector<5x667xf32>, vector<8x667xf32> -> vector<8x667xf32>
    %18 = arith.addf %13, %17 : vector<8x667xf32>
    %c0_18 = arith.constant 0 : index
    %c19 = arith.constant 19 : index
    %19 = vector.load %arg2[%c0_18, %c19] : memref<5x768xf32, #tpu.memory_space<vmem>>, vector<5x667xf32>
    %c4 = arith.constant 4 : index
    %c0_19 = arith.constant 0 : index
    %c0_20 = arith.constant 0 : index
    %20 = vector.load %arg1[%c4, %c0_19, %c0_20] : memref<9x8x5xf32, #tpu.memory_space<vmem>>, vector<1x8x5xf32>
    %21 = vector.shape_cast %20 : vector<1x8x5xf32> to vector<8x5xf32>
    %cst_21 = arith.constant dense<0.000000e+00> : vector<8x667xf32>
    %22 = tpu.matmul %21, %19, %cst_21 {dimension_numbers = #tpu.dot_dimension_numbers<[1], [0], [0], [1], [0, 0, 1, 1], [], []>} : vector<8x5xf32>, vector<5x667xf32>, vector<8x667xf32> -> vector<8x667xf32>
    %23 = arith.addf %18, %22 : vector<8x667xf32>
    %c0_22 = arith.constant 0 : index
    %c20 = arith.constant 20 : index
    %24 = vector.load %arg2[%c0_22, %c20] : memref<5x768xf32, #tpu.memory_space<vmem>>, vector<5x667xf32>
    %c5 = arith.constant 5 : index
    %c0_23 = arith.constant 0 : index
    %c0_24 = arith.constant 0 : index
    %25 = vector.load %arg1[%c5, %c0_23, %c0_24] : memref<9x8x5xf32, #tpu.memory_space<vmem>>, vector<1x8x5xf32>
    %26 = vector.shape_cast %25 : vector<1x8x5xf32> to vector<8x5xf32>
    %cst_25 = arith.constant dense<0.000000e+00> : vector<8x667xf32>
    %27 = tpu.matmul %26, %24, %cst_25 {dimension_numbers = #tpu.dot_dimension_numbers<[1], [0], [0], [1], [0, 0, 1, 1], [], []>} : vector<8x5xf32>, vector<5x667xf32>, vector<8x667xf32> -> vector<8x667xf32>
    %28 = arith.addf %23, %27 : vector<8x667xf32>
    %c0_26 = arith.constant 0 : index
    %c36 = arith.constant 36 : index
    %29 = vector.load %arg2[%c0_26, %c36] : memref<5x768xf32, #tpu.memory_space<vmem>>, vector<5x667xf32>
    %c6 = arith.constant 6 : index
    %c0_27 = arith.constant 0 : index
    %c0_28 = arith.constant 0 : index
    %30 = vector.load %arg1[%c6, %c0_27, %c0_28] : memref<9x8x5xf32, #tpu.memory_space<vmem>>, vector<1x8x5xf32>
    %31 = vector.shape_cast %30 : vector<1x8x5xf32> to vector<8x5xf32>
    %cst_29 = arith.constant dense<0.000000e+00> : vector<8x667xf32>
    %32 = tpu.matmul %31, %29, %cst_29 {dimension_numbers = #tpu.dot_dimension_numbers<[1], [0], [0], [1], [0, 0, 1, 1], [], []>} : vector<8x5xf32>, vector<5x667xf32>, vector<8x667xf32> -> vector<8x667xf32>
    %33 = arith.addf %28, %32 : vector<8x667xf32>
    %c0_30 = arith.constant 0 : index
    %c37 = arith.constant 37 : index
    %34 = vector.load %arg2[%c0_30, %c37] : memref<5x768xf32, #tpu.memory_space<vmem>>, vector<5x667xf32>
    %c7 = arith.constant 7 : index
    %c0_31 = arith.constant 0 : index
    %c0_32 = arith.constant 0 : index
    %35 = vector.load %arg1[%c7, %c0_31, %c0_32] : memref<9x8x5xf32, #tpu.memory_space<vmem>>, vector<1x8x5xf32>
    %36 = vector.shape_cast %35 : vector<1x8x5xf32> to vector<8x5xf32>
    %cst_33 = arith.constant dense<0.000000e+00> : vector<8x667xf32>
    %37 = tpu.matmul %36, %34, %cst_33 {dimension_numbers = #tpu.dot_dimension_numbers<[1], [0], [0], [1], [0, 0, 1, 1], [], []>} : vector<8x5xf32>, vector<5x667xf32>, vector<8x667xf32> -> vector<8x667xf32>
    %38 = arith.addf %33, %37 : vector<8x667xf32>
    %c0_34 = arith.constant 0 : index
    %c38 = arith.constant 38 : index
    %39 = vector.load %arg2[%c0_34, %c38] : memref<5x768xf32, #tpu.memory_space<vmem>>, vector<5x667xf32>
    %c8 = arith.constant 8 : index
    %c0_35 = arith.constant 0 : index
    %c0_36 = arith.constant 0 : index
    %40 = vector.load %arg1[%c8, %c0_35, %c0_36] : memref<9x8x5xf32, #tpu.memory_space<vmem>>, vector<1x8x5xf32>
    %41 = vector.shape_cast %40 : vector<1x8x5xf32> to vector<8x5xf32>
    %cst_37 = arith.constant dense<0.000000e+00> : vector<8x667xf32>
    %42 = tpu.matmul %41, %39, %cst_37 {dimension_numbers = #tpu.dot_dimension_numbers<[1], [0], [0], [1], [0, 0, 1, 1], [], []>} : vector<8x5xf32>, vector<5x667xf32>, vector<8x667xf32> -> vector<8x667xf32>
    %43 = arith.addf %38, %42 : vector<8x667xf32>
    %44 = vector.extract_strided_slice %43 {offsets = [0, 0], sizes = [8, 649], strides = [1, 1]} : vector<8x667xf32> to vector<8x649xf32>
    %45 = vector.extract_strided_slice %43 {offsets = [0, 18], sizes = [8, 649], strides = [1, 1]} : vector<8x667xf32> to vector<8x649xf32>
    %46 = arith.maximumf %44, %45 : vector<8x649xf32>
    %47 = vector.extract_strided_slice %46 {offsets = [0, 0], sizes = [8, 648], strides = [1, 1]} : vector<8x649xf32> to vector<8x648xf32>
    %48 = vector.extract_strided_slice %46 {offsets = [0, 1], sizes = [8, 648], strides = [1, 1]} : vector<8x649xf32> to vector<8x648xf32>
    %49 = arith.maximumf %47, %48 : vector<8x648xf32>
    %50 = math.tanh %49 : vector<8x648xf32>
    %c0_38 = arith.constant 0 : index
    %c0_39 = arith.constant 0 : index
    %51 = vector.load %arg3[%c0_38, %c0_39] : memref<8x648xf32, #tpu.memory_space<vmem>>, vector<8x648xf32>
    tpu.vector_store %arg3[%c0_38, %c0_39], %50 {strides = array<i32>} : memref<8x648xf32, #tpu.memory_space<vmem>>, vector<8x648xf32>,
    return
  }
  func.func @transform_0(%arg0: i32) -> (i32, i32, i32) {
    %c0_i32 = arith.constant 0 : i32
    %c0_i32_0 = arith.constant 0 : i32
    %c0_i32_1 = arith.constant 0 : i32
    %c0_i32_2 = arith.constant 0 : i32
    return %c0_i32, %c0_i32_0, %c0_i32_1 : i32, i32, i32
  }
  func.func @transform_1(%arg0: i32) -> (i32, i32) {
    %c0_i32 = arith.constant 0 : i32
    %c0_i32_0 = arith.constant 0 : i32
    %c0_i32_1 = arith.constant 0 : i32
    return %c0_i32, %c0_i32_0 : i32, i32
  }
  func.func @transform_2(%arg0: i32) -> (i32, i32) {
    %c0_i32 = arith.constant 0 : i32
    %c0_i32_0 = arith.constant 0 : i32
    %c0_i32_1 = arith.constant 0 : i32
    return %c0_i32, %c0_i32_0 : i32, i32
  }
}

</mosaic_0001>

<llo_original>
// kernel: encoder_forward.1
$region0: #{encoder_forward.1}
  #allocation0 [shape = 'u32[]', space=smem, size = 0x4, offset = 0x4, fixed_abs, tag = 'smem constant byte address 0x4 - core index']
  #allocation1 [shape = 'u32[144,128]{1,0:T(1,128)}', space=vmem, size = 0x12000, scoped, tag = 'internal scratch']
  %s0 = inlined_call_operand.vmem [shape: f32[9,8,5], index: 0, kind: input, shape index: {}]
  %s1 = inlined_call_operand.vmem [shape: f32[5,768], index: 1, kind: input, shape index: {}]
  %s2 = inlined_call_operand.vmem [shape: f32[8,648], index: 2, kind: output, shape index: {}]
  %s3 = sld [smem:[#allocation0]]
  $region18: #{encoder_forward.1} parent=0
    _
  %s5 = ssub.s32 1, %s3
  %s6 = scalar_select 0, %s5, %s3
  // Predicated region
  $region2: #{encoder_forward.1} parent=0 // pred_check
    _
  $region3: #{encoder_forward.1} parent=0 // pred_check_branch
    %8 = sbr.rel (0) target = $region5
  $region4: #{encoder_forward.1} parent=0 // pred_region
    _
  $region5: #{encoder_forward.1} parent=0 // pred_fallthru
    _
  // Predicated region
  $region6: #{encoder_forward.1} parent=0 // pred_check
    _
  $region7: #{encoder_forward.1} parent=0 // pred_check_branch
    %10 = sbr.rel (0) target = $region9
  $region8: #{encoder_forward.1} parent=0 // pred_region
    _
  $region9: #{encoder_forward.1} parent=0 // pred_fallthru
    _
  %v11 = vld [vmem:[%s1] sm:$0x1f]
  %v12 = vld [vmem:[%s1 + $0x8] sm:$0x1f]
  %v13 = vld [vmem:[%s1 + $0x10] sm:$0x1f]
  %v14 = vld [vmem:[%s1 + $0x18] sm:$0x1f]
  %v15 = vld [vmem:[%s1 + $0x20] sm:$0x1f]
  %v16 = vld [vmem:[%s1 + $0x28] sm:$0x1f]
  %v17 = vld [vmem:[%s0] sm:$0xff]
  %s18 = scalar_lea.vmem %s0, 8
  %v19 = vld [vmem:[%s18] sm:$0xff]
  %26 = vrot.lane.b32.xlu0 %v11, 127
  %v27 = vpop.permute.xlu0 %26
  %28 = vrot.lane.b32.xlu0 %v12, 127
  %v29 = vpop.permute.xlu0 %28
  %30 = vrot.lane.b32.xlu0 %v13, 127
  %v31 = vpop.permute.xlu0 %30
  %32 = vrot.lane.b32.xlu0 %v14, 127
  %v33 = vpop.permute.xlu0 %32
  %34 = vrot.lane.b32.xlu0 %v15, 127
  %v35 = vpop.permute.xlu0 %34
  %36 = vrot.lane.b32.xlu0 %v16, 127
  %v37 = vpop.permute.xlu0 %36
  %vm38 = vcmask 1039360
  %v39 = vsel %vm38, %v27, %v29
  %v40 = vsel %vm38, %v29, %v31
  %v41 = vsel %vm38, %v31, %v33
  %v42 = vsel %vm38, %v33, %v35
  %v43 = vsel %vm38, %v35, %v37
  %vm44 = vcmask 39936
  %v46 = vsel %vm44, %v19, 0
  %vm48 = vcmask 1044480
  %v49 = vsel %vm48, %v39, 0
  %v51 = vsel %vm48, %v40, 0
  %v53 = vsel %vm48, %v41, 0
  %v55 = vsel %vm48, %v42, 0
  %v57 = vsel %vm48, %v43, 0
  %v59 = vsel %vm48, %v37, 0
  %61 = vmatprep.subr.mxu0 0.0
  %62 = vmatpush1.msra.mxu0 0.0
  %63 = vmatprep.subr.mxu0 0.0
  %64 = vmatpush1.msra.mxu0 0.0
  %65 = vmatprep.subr.mxu0 0.0
  %66 = vmatpush1.msra.mxu0 0.0
  %67 = vmatprep.subr.mxu0 0.0
  %68 = vmatpush1.msra.mxu0 0.0
  %69 = vmatprep.subr.mxu0 0.0
  %70 = vmatpush1.msra.mxu0 0.0
  %71 = vmatprep.subr.mxu0 0.0
  %72 = vmatpush1.msra.mxu0 0.0
  %73 = vmatprep.subr.mxu0 0.0
  %74 = vmatpush1.msra.mxu0 0.0
  %75 = vmatprep.subr.mxu0 0.0
  %76 = vmatpush1.msra.mxu0 0.0
  %77 = vmatprep.subr.mxu0 0.0
  %78 = vmatpush1.msra.mxu0 0.0
  %79 = vmatprep.subr.mxu0 0.0
  %80 = vmatpush1.msra.mxu0 0.0
  %81 = vmatprep.subr.mxu0 0.0
  %82 = vmatpush1.msra.mxu0 0.0
  %83 = vmatprep.subr.mxu0 0.0
  %84 = vmatpush1.msra.mxu0 0.0
  %85 = vmatprep.subr.mxu0 0.0
  %86 = vmatpush1.msra.mxu0 0.0
  %87 = vmatprep.subr.mxu0 0.0
  %88 = vmatpush1.msra.mxu0 0.0
  %89 = vmatprep.subr.mxu0 0.0
  %90 = vmatpush1.msra.mxu0 0.0
  %91 = vmatprep.subr.mxu0 %v51
  %92 = vmatpush1.msra.mxu0 %v49
  %93 = vmatprep.subr.mxu0 0.0
  %94 = vmatpush2.msra.mxu0 0.0
  %95 = vmatprep.subr.mxu0 0.0
  %96 = vmatpush2.msra.mxu0 0.0
  %97 = vmatprep.subr.mxu0 0.0
  %98 = vmatpush2.msra.mxu0 0.0
  %99 = vmatprep.subr.mxu0 0.0
  %100 = vmatpush2.msra.mxu0 0.0
  %101 = vmatprep.subr.mxu0 0.0
  %102 = vmatpush2.msra.mxu0 0.0
  %103 = vmatprep.subr.mxu0 0.0
  %104 = vmatpush2.msra.mxu0 0.0
  %105 = vmatprep.subr.mxu0 0.0
  %106 = vmatpush2.msra.mxu0 0.0
  %107 = vmatprep.subr.mxu0 0.0
  %108 = vmatpush2.msra.mxu0 0.0
  %109 = vmatprep.subr.mxu0 0.0
  %110 = vmatpush2.msra.mxu0 0.0
  %111 = vmatprep.subr.mxu0 0.0
  %112 = vmatpush2.msra.mxu0 0.0
  %113 = vmatprep.subr.mxu0 0.0
  %114 = vmatpush2.msra.mxu0 0.0
  %115 = vmatprep.subr.mxu0 0.0
  %116 = vmatpush2.msra.mxu0 0.0
  %117 = vmatprep.subr.mxu0 0.0
  %118 = vmatpush2.msra.mxu0 0.0
  %119 = vmatprep.subr.mxu0 0.0
  %120 = vmatpush2.msra.mxu0 0.0
  %121 = vmatprep.subr.mxu0 0.0
  %122 = vmatpush2.msra.mxu0 0.0
  %123 = vmatprep.subr.mxu0 0.0
  %124 = vmatpush2.msra.mxu0 0.0
  %125 = vmatprep.mubr.f32.mxu0 0.0
  %126 = vmatmul.mubr.f32.gmra.mxu0 %v46
  %v127 = vpop.f32.mrf.mxu0
  %v128 = vadd.f32 0.0, %v127
  %v129 = vpop.f32.mrf.mxu0
  %v130 = vadd.f32 0.0, %v129
  %131 = vdwg.mxu0
  %132 = vmatprep.subr.mxu0 0.0
  %133 = vmatpush1.msra.mxu0 0.0
  %134 = vmatprep.subr.mxu0 0.0
  %135 = vmatpush1.msra.mxu0 0.0
  %136 = vmatprep.subr.mxu0 0.0
  %137 = vmatpush1.msra.mxu0 0.0
  %138 = vmatprep.subr.mxu0 0.0
  %139 = vmatpush1.msra.mxu0 0.0
  %140 = vmatprep.subr.mxu0 0.0
  %141 = vmatpush1.msra.mxu0 0.0
  %142 = vmatprep.subr.mxu0 0.0
  %143 = vmatpush1.msra.mxu0 0.0
  %144 = vmatprep.subr.mxu0 0.0
  %145 = vmatpush1.msra.mxu0 0.0
  %146 = vmatprep.subr.mxu0 0.0
  %147 = vmatpush1.msra.mxu0 0.0
  %148 = vmatprep.subr.mxu0 0.0
  %149 = vmatpush1.msra.mxu0 0.0
  %150 = vmatprep.subr.mxu0 0.0
  %151 = vmatpush1.msra.mxu0 0.0
  %152 = vmatprep.subr.mxu0 0.0
  %153 = vmatpush1.msra.mxu0 0.0
  %154 = vmatprep.subr.mxu0 0.0
  %155 = vmatpush1.msra.mxu0 0.0
  %156 = vmatprep.subr.mxu0 0.0
  %157 = vmatpush1.msra.mxu0 0.0
  %158 = vmatprep.subr.mxu0 0.0
  %159 = vmatpush1.msra.mxu0 0.0
  %160 = vmatprep.subr.mxu0 0.0
  %161 = vmatpush1.msra.mxu0 0.0
  %162 = vmatprep.subr.mxu0 %v55
  %163 = vmatpush1.msra.mxu0 %v53
  %164 = vmatprep.subr.mxu0 0.0
  %165 = vmatpush2.msra.mxu0 0.0
  %166 = vmatprep.subr.mxu0 0.0
  %167 = vmatpush2.msra.mxu0 0.0
  %168 = vmatprep.subr.mxu0 0.0
  %169 = vmatpush2.msra.mxu0 0.0
  %170 = vmatprep.subr.mxu0 0.0
  %171 = vmatpush2.msra.mxu0 0.0
  %172 = vmatprep.subr.mxu0 0.0
  %173 = vmatpush2.msra.mxu0 0.0
  %174 = vmatprep.subr.mxu0 0.0
  %175 = vmatpush2.msra.mxu0 0.0
  %176 = vmatprep.subr.mxu0 0.0
  %177 = vmatpush2.msra.mxu0 0.0
  %178 = vmatprep.subr.mxu0 0.0
  %179 = vmatpush2.msra.mxu0 0.0
  %180 = vmatprep.subr.mxu0 0.0
  %181 = vmatpush2.msra.mxu0 0.0
  %182 = vmatprep.subr.mxu0 0.0
  %183 = vmatpush2.msra.mxu0 0.0
  %184 = vmatprep.subr.mxu0 0.0
  %185 = vmatpush2.msra.mxu0 0.0
  %186 = vmatprep.subr.mxu0 0.0
  %187 = vmatpush2.msra.mxu0 0.0
  %188 = vmatprep.subr.mxu0 0.0
  %189 = vmatpush2.msra.mxu0 0.0
  %190 = vmatprep.subr.mxu0 0.0
  %191 = vmatpush2.msra.mxu0 0.0
  %192 = vmatprep.subr.mxu0 0.0
  %193 = vmatpush2.msra.mxu0 0.0
  %194 = vmatprep.subr.mxu0 0.0
  %195 = vmatpush2.msra.mxu0 0.0
  %196 = vmatprep.mubr.f32.mxu0 0.0
  %197 = vmatmul.mubr.f32.gmra.mxu0 %v46
  %v198 = vpop.f32.mrf.mxu0
  %v199 = vadd.f32 0.0, %v198
  %v200 = vpop.f32.mrf.mxu0
  %v201 = vadd.f32 0.0, %v200
  %202 = vdwg.mxu0
  %203 = vmatprep.subr.mxu0 0.0
  %204 = vmatpush1.msra.mxu0 0.0
  %205 = vmatprep.subr.mxu0 0.0
  %206 = vmatpush1.msra.mxu0 0.0
  %207 = vmatprep.subr.mxu0 0.0
  %208 = vmatpush1.msra.mxu0 0.0
  %209 = vmatprep.subr.mxu0 0.0
  %210 = vmatpush1.msra.mxu0 0.0
  %211 = vmatprep.subr.mxu0 0.0
  %212 = vmatpush1.msra.mxu0 0.0
  %213 = vmatprep.subr.mxu0 0.0
  %214 = vmatpush1.msra.mxu0 0.0
  %215 = vmatprep.subr.mxu0 0.0
  %216 = vmatpush1.msra.mxu0 0.0
  %217 = vmatprep.subr.mxu0 0.0
  %218 = vmatpush1.msra.mxu0 0.0
  %219 = vmatprep.subr.mxu0 0.0
  %220 = vmatpush1.msra.mxu0 0.0
  %221 = vmatprep.subr.mxu0 0.0
  %222 = vmatpush1.msra.mxu0 0.0
  %223 = vmatprep.subr.mxu0 0.0
  %224 = vmatpush1.msra.mxu0 0.0
  %225 = vmatprep.subr.mxu0 0.0
  %226 = vmatpush1.msra.mxu0 0.0
  %227 = vmatprep.subr.mxu0 0.0
  %228 = vmatpush1.msra.mxu0 0.0
  %229 = vmatprep.subr.mxu0 0.0
  %230 = vmatpush1.msra.mxu0 0.0
  %231 = vmatprep.subr.mxu0 0.0
  %232 = vmatpush1.msra.mxu0 0.0
  %233 = vmatprep.subr.mxu0 %v59
  %234 = vmatpush1.msra.mxu0 %v57
  %235 = vmatprep.subr.mxu0 0.0
  %236 = vmatpush2.msra.mxu0 0.0
  %237 = vmatprep.subr.mxu0 0.0
  %238 = vmatpush2.msra.mxu0 0.0
  %239 = vmatprep.subr.mxu0 0.0
  %240 = vmatpush2.msra.mxu0 0.0
  %241 = vmatprep.subr.mxu0 0.0
  %242 = vmatpush2.msra.mxu0 0.0
  %243 = vmatprep.subr.mxu0 0.0
  %244 = vmatpush2.msra.mxu0 0.0
  %245 = vmatprep.subr.mxu0 0.0
  %246 = vmatpush2.msra.mxu0 0.0
  %247 = vmatprep.subr.mxu0 0.0
  %248 = vmatpush2.msra.mxu0 0.0
  %249 = vmatprep.subr.mxu0 0.0
  %250 = vmatpush2.msra.mxu0 0.0
  %251 = vmatprep.subr.mxu0 0.0
  %252 = vmatpush2.msra.mxu0 0.0
  %253 = vmatprep.subr.mxu0 0.0
  %254 = vmatpush2.msra.mxu0 0.0
  %255 = vmatprep.subr.mxu0 0.0
  %256 = vmatpush2.msra.mxu0 0.0
  %257 = vmatprep.subr.mxu0 0.0
  %258 = vmatpush2.msra.mxu0 0.0
  %259 = vmatprep.subr.mxu0 0.0
  %260 = vmatpush2.msra.mxu0 0.0
  %261 = vmatprep.subr.mxu0 0.0
  %262 = vmatpush2.msra.mxu0 0.0
  %263 = vmatprep.subr.mxu0 0.0
  %264 = vmatpush2.msra.mxu0 0.0
  %265 = vmatprep.subr.mxu0 0.0
  %266 = vmatpush2.msra.mxu0 0.0
  %267 = vmatprep.mubr.f32.mxu0 0.0
  %268 = vmatmul.mubr.f32.gmra.mxu0 %v46
  %v269 = vpop.f32.mrf.mxu0
  %v270 = vadd.f32 0.0, %v269
  %v271 = vpop.f32.mrf.mxu0
  %v272 = vadd.f32 0.0, %v271
  %273 = vdwg.mxu0
  %v275 = vsel %vm44, %v17, 0
  %v277 = vsel %vm48, %v11, 0
  %v279 = vsel %vm48, %v12, 0
  %v281 = vsel %vm48, %v13, 0
  %v283 = vsel %vm48, %v14, 0
  %v285 = vsel %vm48, %v15, 0
  %v287 = vsel %vm48, %v16, 0
  %289 = vmatprep.subr.mxu0 0.0
  %290 = vmatpush1.msra.mxu0 0.0
  %291 = vmatprep.subr.mxu0 0.0
  %292 = vmatpush1.msra.mxu0 0.0
  %293 = vmatprep.subr.mxu0 0.0
  %294 = vmatpush1.msra.mxu0 0.0
  %295 = vmatprep.subr.mxu0 0.0
  %296 = vmatpush1.msra.mxu0 0.0
  %297 = vmatprep.subr.mxu0 0.0
  %298 = vmatpush1.msra.mxu0 0.0
  %299 = vmatprep.subr.mxu0 0.0
  %300 = vmatpush1.msra.mxu0 0.0
  %301 = vmatprep.subr.mxu0 0.0
  %302 = vmatpush1.msra.mxu0 0.0
  %303 = vmatprep.subr.mxu0 0.0
  %304 = vmatpush1.msra.mxu0 0.0
  %305 = vmatprep.subr.mxu0 0.0
  %306 = vmatpush1.msra.mxu0 0.0
  %307 = vmatprep.subr.mxu0 0.0
  %308 = vmatpush1.msra.mxu0 0.0
  %309 = vmatprep.subr.mxu0 0.0
  %310 = vmatpush1.msra.mxu0 0.0
  %311 = vmatprep.subr.mxu0 0.0
  %312 = vmatpush1.msra.mxu0 0.0
  %313 = vmatprep.subr.mxu0 0.0
  %314 = vmatpush1.msra.mxu0 0.0
  %315 = vmatprep.subr.mxu0 0.0
  %316 = vmatpush1.msra.mxu0 0.0
  %317 = vmatprep.subr.mxu0 0.0
  %318 = vmatpush1.msra.mxu0 0.0
  %319 = vmatprep.subr.mxu0 %v279
  %320 = vmatpush1.msra.mxu0 %v277
  %321 = vmatprep.subr.mxu0 0.0
  %322 = vmatpush2.msra.mxu0 0.0
  %323 = vmatprep.subr.mxu0 0.0
  %324 = vmatpush2.msra.mxu0 0.0
  %325 = vmatprep.subr.mxu0 0.0
  %326 = vmatpush2.msra.mxu0 0.0
  %327 = vmatprep.subr.mxu0 0.0
  %328 = vmatpush2.msra.mxu0 0.0
  %329 = vmatprep.subr.mxu0 0.0
  %330 = vmatpush2.msra.mxu0 0.0
  %331 = vmatprep.subr.mxu0 0.0
  %332 = vmatpush2.msra.mxu0 0.0
  %333 = vmatprep.subr.mxu0 0.0
  %334 = vmatpush2.msra.mxu0 0.0
  %335 = vmatprep.subr.mxu0 0.0
  %336 = vmatpush2.msra.mxu0 0.0
  %337 = vmatprep.subr.mxu0 0.0
  %338 = vmatpush2.msra.mxu0 0.0
  %339 = vmatprep.subr.mxu0 0.0
  %340 = vmatpush2.msra.mxu0 0.0
  %341 = vmatprep.subr.mxu0 0.0
  %342 = vmatpush2.msra.mxu0 0.0
  %343 = vmatprep.subr.mxu0 0.0
  %344 = vmatpush2.msra.mxu0 0.0
  %345 = vmatprep.subr.mxu0 0.0
  %346 = vmatpush2.msra.mxu0 0.0
  %347 = vmatprep.subr.mxu0 0.0
  %348 = vmatpush2.msra.mxu0 0.0
  %349 = vmatprep.subr.mxu0 0.0
  %350 = vmatpush2.msra.mxu0 0.0
  %351 = vmatprep.subr.mxu0 0.0
  %352 = vmatpush2.msra.mxu0 0.0
  %353 = vmatprep.mubr.f32.mxu0 0.0
  %354 = vmatmul.mubr.f32.gmra.mxu0 %v275
  %v355 = vpop.f32.mrf.mxu0
  %v356 = vadd.f32 %v128, %v355
  %v357 = vpop.f32.mrf.mxu0
  %v358 = vadd.f32 %v130, %v357
  %359 = vdwg.mxu0
  %360 = vmatprep.subr.mxu0 0.0
  %361 = vmatpush1.msra.mxu0 0.0
  %362 = vmatprep.subr.mxu0 0.0
  %363 = vmatpush1.msra.mxu0 0.0
  %364 = vmatprep.subr.mxu0 0.0
  %365 = vmatpush1.msra.mxu0 0.0
  %366 = vmatprep.subr.mxu0 0.0
  %367 = vmatpush1.msra.mxu0 0.0
  %368 = vmatprep.subr.mxu0 0.0
  %369 = vmatpush1.msra.mxu0 0.0
  %370 = vmatprep.subr.mxu0 0.0
  %371 = vmatpush1.msra.mxu0 0.0
  %372 = vmatprep.subr.mxu0 0.0
  %373 = vmatpush1.msra.mxu0 0.0
  %374 = vmatprep.subr.mxu0 0.0
  %375 = vmatpush1.msra.mxu0 0.0
  %376 = vmatprep.subr.mxu0 0.0
  %377 = vmatpush1.msra.mxu0 0.0
  %378 = vmatprep.subr.mxu0 0.0
  %379 = vmatpush1.msra.mxu0 0.0
  %380 = vmatprep.subr.mxu0 0.0
  %381 = vmatpush1.msra.mxu0 0.0
  %382 = vmatprep.subr.mxu0 0.0
  %383 = vmatpush1.msra.mxu0 0.0
  %384 = vmatprep.subr.mxu0 0.0
  %385 = vmatpush1.msra.mxu0 0.0
  %386 = vmatprep.subr.mxu0 0.0
  %387 = vmatpush1.msra.mxu0 0.0
  %388 = vmatprep.subr.mxu0 0.0
  %389 = vmatpush1.msra.mxu0 0.0
  %390 = vmatprep.subr.mxu0 %v283
  %391 = vmatpush1.msra.mxu0 %v281
  %392 = vmatprep.subr.mxu0 0.0
  %393 = vmatpush2.msra.mxu0 0.0
  %394 = vmatprep.subr.mxu0 0.0
  %395 = vmatpush2.msra.mxu0 0.0
  %396 = vmatprep.subr.mxu0 0.0
  %397 = vmatpush2.msra.mxu0 0.0
  %398 = vmatprep.subr.mxu0 0.0
  %399 = vmatpush2.msra.mxu0 0.0
  %400 = vmatprep.subr.mxu0 0.0
  %401 = vmatpush2.msra.mxu0 0.0
  %402 = vmatprep.subr.mxu0 0.0
  %403 = vmatpush2.msra.mxu0 0.0
  %404 = vmatprep.subr.mxu0 0.0
  %405 = vmatpush2.msra.mxu0 0.0
  %406 = vmatprep.subr.mxu0 0.0
  %407 = vmatpush2.msra.mxu0 0.0
  %408 = vmatprep.subr.mxu0 0.0
  %409 = vmatpush2.msra.mxu0 0.0
  %410 = vmatprep.subr.mxu0 0.0
  %411 = vmatpush2.msra.mxu0 0.0
  %412 = vmatprep.subr.mxu0 0.0
  %413 = vmatpush2.msra.mxu0 0.0
  %414 = vmatprep.subr.mxu0 0.0
  %415 = vmatpush2.msra.mxu0 0.0
  %416 = vmatprep.subr.mxu0 0.0
  %417 = vmatpush2.msra.mxu0 0.0
  %418 = vmatprep.subr.mxu0 0.0
  %419 = vmatpush2.msra.mxu0 0.0
  %420 = vmatprep.subr.mxu0 0.0
  %421 = vmatpush2.msra.mxu0 0.0
  %422 = vmatprep.subr.mxu0 0.0
  %423 = vmatpush2.msra.mxu0 0.0
  %424 = vmatprep.mubr.f32.mxu0 0.0
  %425 = vmatmul.mubr.f32.gmra.mxu0 %v275
  %v426 = vpop.f32.mrf.mxu0
  %v427 = vadd.f32 %v199, %v426
  %v428 = vpop.f32.mrf.mxu0
  %v429 = vadd.f32 %v201, %v428
  %430 = vdwg.mxu0
  %431 = vmatprep.subr.mxu0 0.0
  %432 = vmatpush1.msra.mxu0 0.0
  %433 = vmatprep.subr.mxu0 0.0
  %434 = vmatpush1.msra.mxu0 0.0
  %435 = vmatprep.subr.mxu0 0.0
  %436 = vmatpush1.msra.mxu0 0.0
  %437 = vmatprep.subr.mxu0 0.0
  %438 = vmatpush1.msra.mxu0 0.0
  %439 = vmatprep.subr.mxu0 0.0
  %440 = vmatpush1.msra.mxu0 0.0
  %441 = vmatprep.subr.mxu0 0.0
  %442 = vmatpush1.msra.mxu0 0.0
  %443 = vmatprep.subr.mxu0 0.0
  %444 = vmatpush1.msra.mxu0 0.0
  %445 = vmatprep.subr.mxu0 0.0
  %446 = vmatpush1.msra.mxu0 0.0
  %447 = vmatprep.subr.mxu0 0.0
  %448 = vmatpush1.msra.mxu0 0.0
  %449 = vmatprep.subr.mxu0 0.0
  %450 = vmatpush1.msra.mxu0 0.0
  %451 = vmatprep.subr.mxu0 0.0
  %452 = vmatpush1.msra.mxu0 0.0
  %453 = vmatprep.subr.mxu0 0.0
  %454 = vmatpush1.msra.mxu0 0.0
  %455 = vmatprep.subr.mxu0 0.0
  %456 = vmatpush1.msra.mxu0 0.0
  %457 = vmatprep.subr.mxu0 0.0
  %458 = vmatpush1.msra.mxu0 0.0
  %459 = vmatprep.subr.mxu0 0.0
  %460 = vmatpush1.msra.mxu0 0.0
  %461 = vmatprep.subr.mxu0 %v287
  %462 = vmatpush1.msra.mxu0 %v285
  %463 = vmatprep.subr.mxu0 0.0
  %464 = vmatpush2.msra.mxu0 0.0
  %465 = vmatprep.subr.mxu0 0.0
  %466 = vmatpush2.msra.mxu0 0.0
  %467 = vmatprep.subr.mxu0 0.0
  %468 = vmatpush2.msra.mxu0 0.0
  %469 = vmatprep.subr.mxu0 0.0
  %470 = vmatpush2.msra.mxu0 0.0
  %471 = vmatprep.subr.mxu0 0.0
  %472 = vmatpush2.msra.mxu0 0.0
  %473 = vmatprep.subr.mxu0 0.0
  %474 = vmatpush2.msra.mxu0 0.0
  %475 = vmatprep.subr.mxu0 0.0
  %476 = vmatpush2.msra.mxu0 0.0
  %477 = vmatprep.subr.mxu0 0.0
  %478 = vmatpush2.msra.mxu0 0.0
  %479 = vmatprep.subr.mxu0 0.0
  %480 = vmatpush2.msra.mxu0 0.0
  %481 = vmatprep.subr.mxu0 0.0
  %482 = vmatpush2.msra.mxu0 0.0
  %483 = vmatprep.subr.mxu0 0.0
  %484 = vmatpush2.msra.mxu0 0.0
  %485 = vmatprep.subr.mxu0 0.0
  %486 = vmatpush2.msra.mxu0 0.0
  %487 = vmatprep.subr.mxu0 0.0
  %488 = vmatpush2.msra.mxu0 0.0
  %489 = vmatprep.subr.mxu0 0.0
  %490 = vmatpush2.msra.mxu0 0.0
  %491 = vmatprep.subr.mxu0 0.0
  %492 = vmatpush2.msra.mxu0 0.0
  %493 = vmatprep.subr.mxu0 0.0
  %494 = vmatpush2.msra.mxu0 0.0
  %495 = vmatprep.mubr.f32.mxu0 0.0
  %496 = vmatmul.mubr.f32.gmra.mxu0 %v275
  %v497 = vpop.f32.mrf.mxu0
  %v498 = vadd.f32 %v270, %v497
  %v499 = vpop.f32.mrf.mxu0
  %v500 = vadd.f32 %v272, %v499
  %501 = vdwg.mxu0
  %s502 = scalar_lea.vmem %s0, 16
  %v503 = vld [vmem:[%s502] sm:$0xff]
  %504 = vrot.lane.b32.xlu0 %v11, 126
  %v505 = vpop.permute.xlu0 %504
  %506 = vrot.lane.b32.xlu0 %v12, 126
  %v507 = vpop.permute.xlu0 %506
  %508 = vrot.lane.b32.xlu0 %v13, 126
  %v509 = vpop.permute.xlu0 %508
  %510 = vrot.lane.b32.xlu0 %v14, 126
  %v511 = vpop.permute.xlu0 %510
  %512 = vrot.lane.b32.xlu0 %v15, 126
  %v513 = vpop.permute.xlu0 %512
  %514 = vrot.lane.b32.xlu0 %v16, 126
  %v515 = vpop.permute.xlu0 %514
  %vm516 = vcmask 1031168
  %v517 = vsel %vm516, %v505, %v507
  %v518 = vsel %vm516, %v507, %v509
  %v519 = vsel %vm516, %v509, %v511
  %v520 = vsel %vm516, %v511, %v513
  %v521 = vsel %vm516, %v513, %v515
  %v523 = vsel %vm44, %v503, 0
  %v525 = vsel %vm48, %v517, 0
  %v527 = vsel %vm48, %v518, 0
  %v529 = vsel %vm48, %v519, 0
  %v531 = vsel %vm48, %v520, 0
  %v533 = vsel %vm48, %v521, 0
  %v535 = vsel %vm48, %v515, 0
  %537 = vmatprep.subr.mxu0 0.0
  %538 = vmatpush1.msra.mxu0 0.0
  %539 = vmatprep.subr.mxu0 0.0
  %540 = vmatpush1.msra.mxu0 0.0
  %541 = vmatprep.subr.mxu0 0.0
  %542 = vmatpush1.msra.mxu0 0.0
  %543 = vmatprep.subr.mxu0 0.0
  %544 = vmatpush1.msra.mxu0 0.0
  %545 = vmatprep.subr.mxu0 0.0
  %546 = vmatpush1.msra.mxu0 0.0
  %547 = vmatprep.subr.mxu0 0.0
  %548 = vmatpush1.msra.mxu0 0.0
  %549 = vmatprep.subr.mxu0 0.0
  %550 = vmatpush1.msra.mxu0 0.0
  %551 = vmatprep.subr.mxu0 0.0
  %552 = vmatpush1.msra.mxu0 0.0
  %553 = vmatprep.subr.mxu0 0.0
  %554 = vmatpush1.msra.mxu0 0.0
  %555 = vmatprep.subr.mxu0 0.0
  %556 = vmatpush1.msra.mxu0 0.0
  %557 = vmatprep.subr.mxu0 0.0
  %558 = vmatpush1.msra.mxu0 0.0
  %559 = vmatprep.subr.mxu0 0.0
  %560 = vmatpush1.msra.mxu0 0.0
  %561 = vmatprep.subr.mxu0 0.0
  %562 = vmatpush1.msra.mxu0 0.0
  %563 = vmatprep.subr.mxu0 0.0
  %564 = vmatpush1.msra.mxu0 0.0
  %565 = vmatprep.subr.mxu0 0.0
  %566 = vmatpush1.msra.mxu0 0.0
  %567 = vmatprep.subr.mxu0 %v527
  %568 = vmatpush1.msra.mxu0 %v525
  %569 = vmatprep.subr.mxu0 0.0
  %570 = vmatpush2.msra.mxu0 0.0
  %571 = vmatprep.subr.mxu0 0.0
  %572 = vmatpush2.msra.mxu0 0.0
  %573 = vmatprep.subr.mxu0 0.0
  %574 = vmatpush2.msra.mxu0 0.0
  %575 = vmatprep.subr.mxu0 0.0
  %576 = vmatpush2.msra.mxu0 0.0
  %577 = vmatprep.subr.mxu0 0.0
  %578 = vmatpush2.msra.mxu0 0.0
  %579 = vmatprep.subr.mxu0 0.0
  %580 = vmatpush2.msra.mxu0 0.0
  %581 = vmatprep.subr.mxu0 0.0
  %582 = vmatpush2.msra.mxu0 0.0
  %583 = vmatprep.subr.mxu0 0.0
  %584 = vmatpush2.msra.mxu0 0.0
  %585 = vmatprep.subr.mxu0 0.0
  %586 = vmatpush2.msra.mxu0 0.0
  %587 = vmatprep.subr.mxu0 0.0
  %588 = vmatpush2.msra.mxu0 0.0
  %589 = vmatprep.subr.mxu0 0.0
  %590 = vmatpush2.msra.mxu0 0.0
  %591 = vmatprep.subr.mxu0 0.0
  %592 = vmatpush2.msra.mxu0 0.0
  %593 = vmatprep.subr.mxu0 0.0
  %594 = vmatpush2.msra.mxu0 0.0
  %595 = vmatprep.subr.mxu0 0.0
  %596 = vmatpush2.msra.mxu0 0.0
  %597 = vmatprep.subr.mxu0 0.0
  %598 = vmatpush2.msra.mxu0 0.0
  %599 = vmatprep.subr.mxu0 0.0
  %600 = vmatpush2.msra.mxu0 0.0
  %601 = vmatprep.mubr.f32.mxu0 0.0
  %602 = vmatmul.mubr.f32.gmra.mxu0 %v523
  %v603 = vpop.f32.mrf.mxu0
  %v604 = vadd.f32 0.0, %v603
  %v605 = vpop.f32.mrf.mxu0
  %v606 = vadd.f32 0.0, %v605
  %607 = vdwg.mxu0
  %608 = vmatprep.subr.mxu0 0.0
  %609 = vmatpush1.msra.mxu0 0.0
  %610 = vmatprep.subr.mxu0 0.0
  %611 = vmatpush1.msra.mxu0 0.0
  %612 = vmatprep.subr.mxu0 0.0
  %613 = vmatpush1.msra.mxu0 0.0
  %614 = vmatprep.subr.mxu0 0.0
  %615 = vmatpush1.msra.mxu0 0.0
  %616 = vmatprep.subr.mxu0 0.0
  %617 = vmatpush1.msra.mxu0 0.0
  %618 = vmatprep.subr.mxu0 0.0
  %619 = vmatpush1.msra.mxu0 0.0
  %620 = vmatprep.subr.mxu0 0.0
  %621 = vmatpush1.msra.mxu0 0.0
  %622 = vmatprep.subr.mxu0 0.0
  %623 = vmatpush1.msra.mxu0 0.0
  %624 = vmatprep.subr.mxu0 0.0
  %625 = vmatpush1.msra.mxu0 0.0
  %626 = vmatprep.subr.mxu0 0.0
  %627 = vmatpush1.msra.mxu0 0.0
  %628 = vmatprep.subr.mxu0 0.0
  %629 = vmatpush1.msra.mxu0 0.0
  %630 = vmatprep.subr.mxu0 0.0
  %631 = vmatpush1.msra.mxu0 0.0
  %632 = vmatprep.subr.mxu0 0.0
  %633 = vmatpush1.msra.mxu0 0.0
  %634 = vmatprep.subr.mxu0 0.0
  %635 = vmatpush1.msra.mxu0 0.0
  %636 = vmatprep.subr.mxu0 0.0
  %637 = vmatpush1.msra.mxu0 0.0
  %638 = vmatprep.subr.mxu0 %v531
  %639 = vmatpush1.msra.mxu0 %v529
  %640 = vmatprep.subr.mxu0 0.0
  %641 = vmatpush2.msra.mxu0 0.0
  %642 = vmatprep.subr.mxu0 0.0
  %643 = vmatpush2.msra.mxu0 0.0
  %644 = vmatprep.subr.mxu0 0.0
  %645 = vmatpush2.msra.mxu0 0.0
  %646 = vmatprep.subr.mxu0 0.0
  %647 = vmatpush2.msra.mxu0 0.0
  %648 = vmatprep.subr.mxu0 0.0
  %649 = vmatpush2.msra.mxu0 0.0
  %650 = vmatprep.subr.mxu0 0.0
  %651 = vmatpush2.msra.mxu0 0.0
  %652 = vmatprep.subr.mxu0 0.0
  %653 = vmatpush2.msra.mxu0 0.0
  %654 = vmatprep.subr.mxu0 0.0
  %655 = vmatpush2.msra.mxu0 0.0
  %656 = vmatprep.subr.mxu0 0.0
  %657 = vmatpush2.msra.mxu0 0.0
  %658 = vmatprep.subr.mxu0 0.0
  %659 = vmatpush2.msra.mxu0 0.0
  %660 = vmatprep.subr.mxu0 0.0
  %661 = vmatpush2.msra.mxu0 0.0
  %662 = vmatprep.subr.mxu0 0.0
  %663 = vmatpush2.msra.mxu0 0.0
  %664 = vmatprep.subr.mxu0 0.0
  %665 = vmatpush2.msra.mxu0 0.0
  %666 = vmatprep.subr.mxu0 0.0
  %667 = vmatpush2.msra.mxu0 0.0
  %668 = vmatprep.subr.mxu0 0.0
  %669 = vmatpush2.msra.mxu0 0.0
  %670 = vmatprep.subr.mxu0 0.0
  %671 = vmatpush2.msra.mxu0 0.0
  %672 = vmatprep.mubr.f32.mxu0 0.0
  %673 = vmatmul.mubr.f32.gmra.mxu0 %v523
  %v674 = vpop.f32.mrf.mxu0
  %v675 = vadd.f32 0.0, %v674
  %v676 = vpop.f32.mrf.mxu0
  %v677 = vadd.f32 0.0, %v676
  %678 = vdwg.mxu0
  %679 = vmatprep.subr.mxu0 0.0
  %680 = vmatpush1.msra.mxu0 0.0
  %681 = vmatprep.subr.mxu0 0.0
  %682 = vmatpush1.msra.mxu0 0.0
  %683 = vmatprep.subr.mxu0 0.0
  %684 = vmatpush1.msra.mxu0 0.0
  %685 = vmatprep.subr.mxu0 0.0
  %686 = vmatpush1.msra.mxu0 0.0
  %687 = vmatprep.subr.mxu0 0.0
  %688 = vmatpush1.msra.mxu0 0.0
  %689 = vmatprep.subr.mxu0 0.0
  %690 = vmatpush1.msra.mxu0 0.0
  %691 = vmatprep.subr.mxu0 0.0
  %692 = vmatpush1.msra.mxu0 0.0
  %693 = vmatprep.subr.mxu0 0.0
  %694 = vmatpush1.msra.mxu0 0.0
  %695 = vmatprep.subr.mxu0 0.0
  %696 = vmatpush1.msra.mxu0 0.0
  %697 = vmatprep.subr.mxu0 0.0
  %698 = vmatpush1.msra.mxu0 0.0
  %699 = vmatprep.subr.mxu0 0.0
  %700 = vmatpush1.msra.mxu0 0.0
  %701 = vmatprep.subr.mxu0 0.0
  %702 = vmatpush1.msra.mxu0 0.0
  %703 = vmatprep.subr.mxu0 0.0
  %704 = vmatpush1.msra.mxu0 0.0
  %705 = vmatprep.subr.mxu0 0.0
  %706 = vmatpush1.msra.mxu0 0.0
  %707 = vmatprep.subr.mxu0 0.0
  %708 = vmatpush1.msra.mxu0 0.0
  %709 = vmatprep.subr.mxu0 %v535
  %710 = vmatpush1.msra.mxu0 %v533
  %711 = vmatprep.subr.mxu0 0.0
  %712 = vmatpush2.msra.mxu0 0.0
  %713 = vmatprep.subr.mxu0 0.0
  %714 = vmatpush2.msra.mxu0 0.0
  %715 = vmatprep.subr.mxu0 0.0
  %716 = vmatpush2.msra.mxu0 0.0
  %717 = vmatprep.subr.mxu0 0.0
  %718 = vmatpush2.msra.mxu0 0.0
  %719 = vmatprep.subr.mxu0 0.0
  %720 = vmatpush2.msra.mxu0 0.0
  %721 = vmatprep.subr.mxu0 0.0
  %722 = vmatpush2.msra.mxu0 0.0
  %723 = vmatprep.subr.mxu0 0.0
  %724 = vmatpush2.msra.mxu0 0.0
  %725 = vmatprep.subr.mxu0 0.0
  %726 = vmatpush2.msra.mxu0 0.0
  %727 = vmatprep.subr.mxu0 0.0
  %728 = vmatpush2.msra.mxu0 0.0
  %729 = vmatprep.subr.mxu0 0.0
  %730 = vmatpush2.msra.mxu0 0.0
  %731 = vmatprep.subr.mxu0 0.0
  %732 = vmatpush2.msra.mxu0 0.0
  %733 = vmatprep.subr.mxu0 0.0
  %734 = vmatpush2.msra.mxu0 0.0
  %735 = vmatprep.subr.mxu0 0.0
  %736 = vmatpush2.msra.mxu0 0.0
  %737 = vmatprep.subr.mxu0 0.0
  %738 = vmatpush2.msra.mxu0 0.0
  %739 = vmatprep.subr.mxu0 0.0
  %740 = vmatpush2.msra.mxu0 0.0
  %741 = vmatprep.subr.mxu0 0.0
  %742 = vmatpush2.msra.mxu0 0.0
  %743 = vmatprep.mubr.f32.mxu0 0.0
  %744 = vmatmul.mubr.f32.gmra.mxu0 %v523
  %v745 = vpop.f32.mrf.mxu0
  %v746 = vadd.f32 0.0, %v745
  %v747 = vpop.f32.mrf.mxu0
  %v748 = vadd.f32 0.0, %v747
  %749 = vdwg.mxu0
  %v750 = vadd.f32 %v356, %v604
  %v751 = vadd.f32 %v358, %v606
  %v752 = vadd.f32 %v427, %v675
  %v753 = vadd.f32 %v429, %v677
  %v754 = vadd.f32 %v498, %v746
  %v755 = vadd.f32 %v500, %v748
  %s756 = scalar_lea.vmem %s0, 24
  %v757 = vld [vmem:[%s756] sm:$0xff]
  %758 = vrot.lane.b32.xlu0 %v11, 110
  %v759 = vpop.permute.xlu0 %758
  %760 = vrot.lane.b32.xlu0 %v12, 110
  %v761 = vpop.permute.xlu0 %760
  %762 = vrot.lane.b32.xlu0 %v13, 110
  %v763 = vpop.permute.xlu0 %762
  %764 = vrot.lane.b32.xlu0 %v14, 110
  %v765 = vpop.permute.xlu0 %764
  %766 = vrot.lane.b32.xlu0 %v15, 110
  %v767 = vpop.permute.xlu0 %766
  %768 = vrot.lane.b32.xlu0 %v16, 110
  %v769 = vpop.permute.xlu0 %768
  %vm770 = vcmask 900096
  %v771 = vsel %vm770, %v759, %v761
  %v772 = vsel %vm770, %v761, %v763
  %v773 = vsel %vm770, %v763, %v765
  %v774 = vsel %vm770, %v765, %v767
  %v775 = vsel %vm770, %v767, %v769
  %v777 = vsel %vm44, %v757, 0
  %v779 = vsel %vm48, %v771, 0
  %v781 = vsel %vm48, %v772, 0
  %v783 = vsel %vm48, %v773, 0
  %v785 = vsel %vm48, %v774, 0
  %v787 = vsel %vm48, %v775, 0
  %v789 = vsel %vm48, %v769, 0
  %791 = vmatprep.subr.mxu0 0.0
  %792 = vmatpush1.msra.mxu0 0.0
  %793 = vmatprep.subr.mxu0 0.0
  %794 = vmatpush1.msra.mxu0 0.0
  %795 = vmatprep.subr.mxu0 0.0
  %796 = vmatpush1.msra.mxu0 0.0
  %797 = vmatprep.subr.mxu0 0.0
  %798 = vmatpush1.msra.mxu0 0.0
  %799 = vmatprep.subr.mxu0 0.0
  %800 = vmatpush1.msra.mxu0 0.0
  %801 = vmatprep.subr.mxu0 0.0
  %802 = vmatpush1.msra.mxu0 0.0
  %803 = vmatprep.subr.mxu0 0.0
  %804 = vmatpush1.msra.mxu0 0.0
  %805 = vmatprep.subr.mxu0 0.0
  %806 = vmatpush1.msra.mxu0 0.0
  %807 = vmatprep.subr.mxu0 0.0
  %808 = vmatpush1.msra.mxu0 0.0
  %809 = vmatprep.subr.mxu0 0.0
  %810 = vmatpush1.msra.mxu0 0.0
  %811 = vmatprep.subr.mxu0 0.0
  %812 = vmatpush1.msra.mxu0 0.0
  %813 = vmatprep.subr.mxu0 0.0
  %814 = vmatpush1.msra.mxu0 0.0
  %815 = vmatprep.subr.mxu0 0.0
  %816 = vmatpush1.msra.mxu0 0.0
  %817 = vmatprep.subr.mxu0 0.0
  %818 = vmatpush1.msra.mxu0 0.0
  %819 = vmatprep.subr.mxu0 0.0
  %820 = vmatpush1.msra.mxu0 0.0
  %821 = vmatprep.subr.mxu0 %v781
  %822 = vmatpush1.msra.mxu0 %v779
  %823 = vmatprep.subr.mxu0 0.0
  %824 = vmatpush2.msra.mxu0 0.0
  %825 = vmatprep.subr.mxu0 0.0
  %826 = vmatpush2.msra.mxu0 0.0
  %827 = vmatprep.subr.mxu0 0.0
  %828 = vmatpush2.msra.mxu0 0.0
  %829 = vmatprep.subr.mxu0 0.0
  %830 = vmatpush2.msra.mxu0 0.0
  %831 = vmatprep.subr.mxu0 0.0
  %832 = vmatpush2.msra.mxu0 0.0
  %833 = vmatprep.subr.mxu0 0.0
  %834 = vmatpush2.msra.mxu0 0.0
  %835 = vmatprep.subr.mxu0 0.0
  %836 = vmatpush2.msra.mxu0 0.0
  %837 = vmatprep.subr.mxu0 0.0
  %838 = vmatpush2.msra.mxu0 0.0
  %839 = vmatprep.subr.mxu0 0.0
  %840 = vmatpush2.msra.mxu0 0.0
  %841 = vmatprep.subr.mxu0 0.0
  %842 = vmatpush2.msra.mxu0 0.0
  %843 = vmatprep.subr.mxu0 0.0
  %844 = vmatpush2.msra.mxu0 0.0
  %845 = vmatprep.subr.mxu0 0.0
  %846 = vmatpush2.msra.mxu0 0.0
  %847 = vmatprep.subr.mxu0 0.0
  %848 = vmatpush2.msra.mxu0 0.0
  %849 = vmatprep.subr.mxu0 0.0
  %850 = vmatpush2.msra.mxu0 0.0
  %851 = vmatprep.subr.mxu0 0.0
  %852 = vmatpush2.msra.mxu0 0.0
  %853 = vmatprep.subr.mxu0 0.0
  %854 = vmatpush2.msra.mxu0 0.0
  %855 = vmatprep.mubr.f32.mxu0 0.0
  %856 = vmatmul.mubr.f32.gmra.mxu0 %v777
  %v857 = vpop.f32.mrf.mxu0
  %v858 = vadd.f32 0.0, %v857
  %v859 = vpop.f32.mrf.mxu0
  %v860 = vadd.f32 0.0, %v859
  %861 = vdwg.mxu0
  %862 = vmatprep.subr.mxu0 0.0
  %863 = vmatpush1.msra.mxu0 0.0
  %864 = vmatprep.subr.mxu0 0.0
  %865 = vmatpush1.msra.mxu0 0.0
  %866 = vmatprep.subr.mxu0 0.0
  %867 = vmatpush1.msra.mxu0 0.0
  %868 = vmatprep.subr.mxu0 0.0
  %869 = vmatpush1.msra.mxu0 0.0
  %870 = vmatprep.subr.mxu0 0.0
  %871 = vmatpush1.msra.mxu0 0.0
  %872 = vmatprep.subr.mxu0 0.0
  %873 = vmatpush1.msra.mxu0 0.0
  %874 = vmatprep.subr.mxu0 0.0
  %875 = vmatpush1.msra.mxu0 0.0
  %876 = vmatprep.subr.mxu0 0.0
  %877 = vmatpush1.msra.mxu0 0.0
  %878 = vmatprep.subr.mxu0 0.0
  %879 = vmatpush1.msra.mxu0 0.0
  %880 = vmatprep.subr.mxu0 0.0
  %881 = vmatpush1.msra.mxu0 0.0
  %882 = vmatprep.subr.mxu0 0.0
  %883 = vmatpush1.msra.mxu0 0.0
  %884 = vmatprep.subr.mxu0 0.0
  %885 = vmatpush1.msra.mxu0 0.0
  %886 = vmatprep.subr.mxu0 0.0
  %887 = vmatpush1.msra.mxu0 0.0
  %888 = vmatprep.subr.mxu0 0.0
  %889 = vmatpush1.msra.mxu0 0.0
  %890 = vmatprep.subr.mxu0 0.0
  %891 = vmatpush1.msra.mxu0 0.0
  %892 = vmatprep.subr.mxu0 %v785
  %893 = vmatpush1.msra.mxu0 %v783
  %894 = vmatprep.subr.mxu0 0.0
  %895 = vmatpush2.msra.mxu0 0.0
  %896 = vmatprep.subr.mxu0 0.0
  %897 = vmatpush2.msra.mxu0 0.0
  %898 = vmatprep.subr.mxu0 0.0
  %899 = vmatpush2.msra.mxu0 0.0
  %900 = vmatprep.subr.mxu0 0.0
  %901 = vmatpush2.msra.mxu0 0.0
  %902 = vmatprep.subr.mxu0 0.0
  %903 = vmatpush2.msra.mxu0 0.0
  %904 = vmatprep.subr.mxu0 0.0
  %905 = vmatpush2.msra.mxu0 0.0
  %906 = vmatprep.subr.mxu0 0.0
  %907 = vmatpush2.msra.mxu0 0.0
  %908 = vmatprep.subr.mxu0 0.0
  %909 = vmatpush2.msra.mxu0 0.0
  %910 = vmatprep.subr.mxu0 0.0
  %911 = vmatpush2.msra.mxu0 0.0
  %912 = vmatprep.subr.mxu0 0.0
  %913 = vmatpush2.msra.mxu0 0.0
  %914 = vmatprep.subr.mxu0 0.0
  %915 = vmatpush2.msra.mxu0 0.0
  %916 = vmatprep.subr.mxu0 0.0
  %917 = vmatpush2.msra.mxu0 0.0
  %918 = vmatprep.subr.mxu0 0.0
  %919 = vmatpush2.msra.mxu0 0.0
  %920 = vmatprep.subr.mxu0 0.0
  %921 = vmatpush2.msra.mxu0 0.0
  %922 = vmatprep.subr.mxu0 0.0
  %923 = vmatpush2.msra.mxu0 0.0
  %924 = vmatprep.subr.mxu0 0.0
  %925 = vmatpush2.msra.mxu0 0.0
  %926 = vmatprep.mubr.f32.mxu0 0.0
  %927 = vmatmul.mubr.f32.gmra.mxu0 %v777
  %v928 = vpop.f32.mrf.mxu0
  %v929 = vadd.f32 0.0, %v928
  %v930 = vpop.f32.mrf.mxu0
  %v931 = vadd.f32 0.0, %v930
  %932 = vdwg.mxu0
  %933 = vmatprep.subr.mxu0 0.0
  %934 = vmatpush1.msra.mxu0 0.0
  %935 = vmatprep.subr.mxu0 0.0
  %936 = vmatpush1.msra.mxu0 0.0
  %937 = vmatprep.subr.mxu0 0.0
  %938 = vmatpush1.msra.mxu0 0.0
  %939 = vmatprep.subr.mxu0 0.0
  %940 = vmatpush1.msra.mxu0 0.0
  %941 = vmatprep.subr.mxu0 0.0
  %942 = vmatpush1.msra.mxu0 0.0
  %943 = vmatprep.subr.mxu0 0.0
  %944 = vmatpush1.msra.mxu0 0.0
  %945 = vmatprep.subr.mxu0 0.0
  %946 = vmatpush1.msra.mxu0 0.0
  %947 = vmatprep.subr.mxu0 0.0
  %948 = vmatpush1.msra.mxu0 0.0
  %949 = vmatprep.subr.mxu0 0.0
  %950 = vmatpush1.msra.mxu0 0.0
  %951 = vmatprep.subr.mxu0 0.0
  %952 = vmatpush1.msra.mxu0 0.0
  %953 = vmatprep.subr.mxu0 0.0
  %954 = vmatpush1.msra.mxu0 0.0
  %955 = vmatprep.subr.mxu0 0.0
  %956 = vmatpush1.msra.mxu0 0.0
  %957 = vmatprep.subr.mxu0 0.0
  %958 = vmatpush1.msra.mxu0 0.0
  %959 = vmatprep.subr.mxu0 0.0
  %960 = vmatpush1.msra.mxu0 0.0
  %961 = vmatprep.subr.mxu0 0.0
  %962 = vmatpush1.msra.mxu0 0.0
  %963 = vmatprep.subr.mxu0 %v789
  %964 = vmatpush1.msra.mxu0 %v787
  %965 = vmatprep.subr.mxu0 0.0
  %966 = vmatpush2.msra.mxu0 0.0
  %967 = vmatprep.subr.mxu0 0.0
  %968 = vmatpush2.msra.mxu0 0.0
  %969 = vmatprep.subr.mxu0 0.0
  %970 = vmatpush2.msra.mxu0 0.0
  %971 = vmatprep.subr.mxu0 0.0
  %972 = vmatpush2.msra.mxu0 0.0
  %973 = vmatprep.subr.mxu0 0.0
  %974 = vmatpush2.msra.mxu0 0.0
  %975 = vmatprep.subr.mxu0 0.0
  %976 = vmatpush2.msra.mxu0 0.0
  %977 = vmatprep.subr.mxu0 0.0
  %978 = vmatpush2.msra.mxu0 0.0
  %979 = vmatprep.subr.mxu0 0.0
  %980 = vmatpush2.msra.mxu0 0.0
  %981 = vmatprep.subr.mxu0 0.0
  %982 = vmatpush2.msra.mxu0 0.0
  %983 = vmatprep.subr.mxu0 0.0
  %984 = vmatpush2.msra.mxu0 0.0
  %985 = vmatprep.subr.mxu0 0.0
  %986 = vmatpush2.msra.mxu0 0.0
  %987 = vmatprep.subr.mxu0 0.0
  %988 = vmatpush2.msra.mxu0 0.0
  %989 = vmatprep.subr.mxu0 0.0
  %990 = vmatpush2.msra.mxu0 0.0
  %991 = vmatprep.subr.mxu0 0.0
  %992 = vmatpush2.msra.mxu0 0.0
  %993 = vmatprep.subr.mxu0 0.0
  %994 = vmatpush2.msra.mxu0 0.0
  %995 = vmatprep.subr.mxu0 0.0
  %996 = vmatpush2.msra.mxu0 0.0
  %997 = vmatprep.mubr.f32.mxu0 0.0
  %998 = vmatmul.mubr.f32.gmra.mxu0 %v777
  %v999 = vpop.f32.mrf.mxu0
  %v1000 = vadd.f32 0.0, %v999
  %v1001 = vpop.f32.mrf.mxu0
  %v1002 = vadd.f32 0.0, %v1001
  %1003 = vdwg.mxu0
  %v1004 = vadd.f32 %v750, %v858
  %v1005 = vadd.f32 %v751, %v860
  %v1006 = vadd.f32 %v752, %v929
  %v1007 = vadd.f32 %v753, %v931
  %v1008 = vadd.f32 %v754, %v1000
  %v1009 = vadd.f32 %v755, %v1002
  %s1010 = scalar_lea.vmem %s0, 32
  %v1011 = vld [vmem:[%s1010] sm:$0xff]
  %1012 = vrot.lane.b32.xlu0 %v11, 109
  %v1013 = vpop.permute.xlu0 %1012
  %1014 = vrot.lane.b32.xlu0 %v12, 109
  %v1015 = vpop.permute.xlu0 %1014
  %1016 = vrot.lane.b32.xlu0 %v13, 109
  %v1017 = vpop.permute.xlu0 %1016
  %1018 = vrot.lane.b32.xlu0 %v14, 109
  %v1019 = vpop.permute.xlu0 %1018
  %1020 = vrot.lane.b32.xlu0 %v15, 109
  %v1021 = vpop.permute.xlu0 %1020
  %1022 = vrot.lane.b32.xlu0 %v16, 109
  %v1023 = vpop.permute.xlu0 %1022
  %vm1024 = vcmask 891904
  %v1025 = vsel %vm1024, %v1013, %v1015
  %v1026 = vsel %vm1024, %v1015, %v1017
  %v1027 = vsel %vm1024, %v1017, %v1019
  %v1028 = vsel %vm1024, %v1019, %v1021
  %v1029 = vsel %vm1024, %v1021, %v1023
  %v1031 = vsel %vm44, %v1011, 0
  %v1033 = vsel %vm48, %v1025, 0
  %v1035 = vsel %vm48, %v1026, 0
  %v1037 = vsel %vm48, %v1027, 0
  %v1039 = vsel %vm48, %v1028, 0
  %v1041 = vsel %vm48, %v1029, 0
  %v1043 = vsel %vm48, %v1023, 0
  %1045 = vmatprep.subr.mxu0 0.0
  %1046 = vmatpush1.msra.mxu0 0.0
  %1047 = vmatprep.subr.mxu0 0.0
  %1048 = vmatpush1.msra.mxu0 0.0
  %1049 = vmatprep.subr.mxu0 0.0
  %1050 = vmatpush1.msra.mxu0 0.0
  %1051 = vmatprep.subr.mxu0 0.0
  %1052 = vmatpush1.msra.mxu0 0.0
  %1053 = vmatprep.subr.mxu0 0.0
  %1054 = vmatpush1.msra.mxu0 0.0
  %1055 = vmatprep.subr.mxu0 0.0
  %1056 = vmatpush1.msra.mxu0 0.0
  %1057 = vmatprep.subr.mxu0 0.0
  %1058 = vmatpush1.msra.mxu0 0.0
  %1059 = vmatprep.subr.mxu0 0.0
  %1060 = vmatpush1.msra.mxu0 0.0
  %1061 = vmatprep.subr.mxu0 0.0
  %1062 = vmatpush1.msra.mxu0 0.0
  %1063 = vmatprep.subr.mxu0 0.0
  %1064 = vmatpush1.msra.mxu0 0.0
  %1065 = vmatprep.subr.mxu0 0.0
  %1066 = vmatpush1.msra.mxu0 0.0
  %1067 = vmatprep.subr.mxu0 0.0
  %1068 = vmatpush1.msra.mxu0 0.0
  %1069 = vmatprep.subr.mxu0 0.0
  %1070 = vmatpush1.msra.mxu0 0.0
  %1071 = vmatprep.subr.mxu0 0.0
  %1072 = vmatpush1.msra.mxu0 0.0
  %1073 = vmatprep.subr.mxu0 0.0
  %1074 = vmatpush1.msra.mxu0 0.0
  %1075 = vmatprep.subr.mxu0 %v1035
  %1076 = vmatpush1.msra.mxu0 %v1033
  %1077 = vmatprep.subr.mxu0 0.0
  %1078 = vmatpush2.msra.mxu0 0.0
  %1079 = vmatprep.subr.mxu0 0.0
  %1080 = vmatpush2.msra.mxu0 0.0
  %1081 = vmatprep.subr.mxu0 0.0
  %1082 = vmatpush2.msra.mxu0 0.0
  %1083 = vmatprep.subr.mxu0 0.0
  %1084 = vmatpush2.msra.mxu0 0.0
  %1085 = vmatprep.subr.mxu0 0.0
  %1086 = vmatpush2.msra.mxu0 0.0
  %1087 = vmatprep.subr.mxu0 0.0
  %1088 = vmatpush2.msra.mxu0 0.0
  %1089 = vmatprep.subr.mxu0 0.0
  %1090 = vmatpush2.msra.mxu0 0.0
  %1091 = vmatprep.subr.mxu0 0.0
  %1092 = vmatpush2.msra.mxu0 0.0
  %1093 = vmatprep.subr.mxu0 0.0
  %1094 = vmatpush2.msra.mxu0 0.0
  %1095 = vmatprep.subr.mxu0 0.0
  %1096 = vmatpush2.msra.mxu0 0.0
  %1097 = vmatprep.subr.mxu0 0.0
  %1098 = vmatpush2.msra.mxu0 0.0
  %1099 = vmatprep.subr.mxu0 0.0
  %1100 = vmatpush2.msra.mxu0 0.0
  %1101 = vmatprep.subr.mxu0 0.0
  %1102 = vmatpush2.msra.mxu0 0.0
  %1103 = vmatprep.subr.mxu0 0.0
  %1104 = vmatpush2.msra.mxu0 0.0
  %1105 = vmatprep.subr.mxu0 0.0
  %1106 = vmatpush2.msra.mxu0 0.0
  %1107 = vmatprep.subr.mxu0 0.0
  %1108 = vmatpush2.msra.mxu0 0.0
  %1109 = vmatprep.mubr.f32.mxu0 0.0
  %1110 = vmatmul.mubr.f32.gmra.mxu0 %v1031
  %v1111 = vpop.f32.mrf.mxu0
  %v1112 = vadd.f32 0.0, %v1111
  %v1113 = vpop.f32.mrf.mxu0
  %v1114 = vadd.f32 0.0, %v1113
  %1115 = vdwg.mxu0
  %1116 = vmatprep.subr.mxu0 0.0
  %1117 = vmatpush1.msra.mxu0 0.0
  %1118 = vmatprep.subr.mxu0 0.0
  %1119 = vmatpush1.msra.mxu0 0.0
  %1120 = vmatprep.subr.mxu0 0.0
  %1121 = vmatpush1.msra.mxu0 0.0
  %1122 = vmatprep.subr.mxu0 0.0
  %1123 = vmatpush1.msra.mxu0 0.0
  %1124 = vmatprep.subr.mxu0 0.0
  %1125 = vmatpush1.msra.mxu0 0.0
  %1126 = vmatprep.subr.mxu0 0.0
  %1127 = vmatpush1.msra.mxu0 0.0
  %1128 = vmatprep.subr.mxu0 0.0
  %1129 = vmatpush1.msra.mxu0 0.0
  %1130 = vmatprep.subr.mxu0 0.0
  %1131 = vmatpush1.msra.mxu0 0.0
  %1132 = vmatprep.subr.mxu0 0.0
  %1133 = vmatpush1.msra.mxu0 0.0
  %1134 = vmatprep.subr.mxu0 0.0
  %1135 = vmatpush1.msra.mxu0 0.0
  %1136 = vmatprep.subr.mxu0 0.0
  %1137 = vmatpush1.msra.mxu0 0.0
  %1138 = vmatprep.subr.mxu0 0.0
  %1139 = vmatpush1.msra.mxu0 0.0
  %1140 = vmatprep.subr.mxu0 0.0
  %1141 = vmatpush1.msra.mxu0 0.0
  %1142 = vmatprep.subr.mxu0 0.0
  %1143 = vmatpush1.msra.mxu0 0.0
  %1144 = vmatprep.subr.mxu0 0.0
  %1145 = vmatpush1.msra.mxu0 0.0
  %1146 = vmatprep.subr.mxu0 %v1039
  %1147 = vmatpush1.msra.mxu0 %v1037
  %1148 = vmatprep.subr.mxu0 0.0
  %1149 = vmatpush2.msra.mxu0 0.0
  %1150 = vmatprep.subr.mxu0 0.0
  %1151 = vmatpush2.msra.mxu0 0.0
  %1152 = vmatprep.subr.mxu0 0.0
  %1153 = vmatpush2.msra.mxu0 0.0
  %1154 = vmatprep.subr.mxu0 0.0
  %1155 = vmatpush2.msra.mxu0 0.0
  %1156 = vmatprep.subr.mxu0 0.0
  %1157 = vmatpush2.msra.mxu0 0.0
  %1158 = vmatprep.subr.mxu0 0.0
  %1159 = vmatpush2.msra.mxu0 0.0
  %1160 = vmatprep.subr.mxu0 0.0
  %1161 = vmatpush2.msra.mxu0 0.0
  %1162 = vmatprep.subr.mxu0 0.0
  %1163 = vmatpush2.msra.mxu0 0.0
  %1164 = vmatprep.subr.mxu0 0.0
  %1165 = vmatpush2.msra.mxu0 0.0
  %1166 = vmatprep.subr.mxu0 0.0
  %1167 = vmatpush2.msra.mxu0 0.0
  %1168 = vmatprep.subr.mxu0 0.0
  %1169 = vmatpush2.msra.mxu0 0.0
  %1170 = vmatprep.subr.mxu0 0.0
  %1171 = vmatpush2.msra.mxu0 0.0
  %1172 = vmatprep.subr.mxu0 0.0
  %1173 = vmatpush2.msra.mxu0 0.0
  %1174 = vmatprep.subr.mxu0 0.0
  %1175 = vmatpush2.msra.mxu0 0.0
  %1176 = vmatprep.subr.mxu0 0.0
  %1177 = vmatpush2.msra.mxu0 0.0
  %1178 = vmatprep.subr.mxu0 0.0
  %1179 = vmatpush2.msra.mxu0 0.0
  %1180 = vmatprep.mubr.f32.mxu0 0.0
  %1181 = vmatmul.mubr.f32.gmra.mxu0 %v1031
  %v1182 = vpop.f32.mrf.mxu0
  %v1183 = vadd.f32 0.0, %v1182
  %v1184 = vpop.f32.mrf.mxu0
  %v1185 = vadd.f32 0.0, %v1184
  %1186 = vdwg.mxu0
  %1187 = vmatprep.subr.mxu0 0.0
  %1188 = vmatpush1.msra.mxu0 0.0
  %1189 = vmatprep.subr.mxu0 0.0
  %1190 = vmatpush1.msra.mxu0 0.0
  %1191 = vmatprep.subr.mxu0 0.0
  %1192 = vmatpush1.msra.mxu0 0.0
  %1193 = vmatprep.subr.mxu0 0.0
  %1194 = vmatpush1.msra.mxu0 0.0
  %1195 = vmatprep.subr.mxu0 0.0
  %1196 = vmatpush1.msra.mxu0 0.0
  %1197 = vmatprep.subr.mxu0 0.0
  %1198 = vmatpush1.msra.mxu0 0.0
  %1199 = vmatprep.subr.mxu0 0.0
  %1200 = vmatpush1.msra.mxu0 0.0
  %1201 = vmatprep.subr.mxu0 0.0
  %1202 = vmatpush1.msra.mxu0 0.0
  %1203 = vmatprep.subr.mxu0 0.0
  %1204 = vmatpush1.msra.mxu0 0.0
  %1205 = vmatprep.subr.mxu0 0.0
  %1206 = vmatpush1.msra.mxu0 0.0
  %1207 = vmatprep.subr.mxu0 0.0
  %1208 = vmatpush1.msra.mxu0 0.0
  %1209 = vmatprep.subr.mxu0 0.0
  %1210 = vmatpush1.msra.mxu0 0.0
  %1211 = vmatprep.subr.mxu0 0.0
  %1212 = vmatpush1.msra.mxu0 0.0
  %1213 = vmatprep.subr.mxu0 0.0
  %1214 = vmatpush1.msra.mxu0 0.0
  %1215 = vmatprep.subr.mxu0 0.0
  %1216 = vmatpush1.msra.mxu0 0.0
  %1217 = vmatprep.subr.mxu0 %v1043
  %1218 = vmatpush1.msra.mxu0 %v1041
  %1219 = vmatprep.subr.mxu0 0.0
  %1220 = vmatpush2.msra.mxu0 0.0
  %1221 = vmatprep.subr.mxu0 0.0
  %1222 = vmatpush2.msra.mxu0 0.0
  %1223 = vmatprep.subr.mxu0 0.0
  %1224 = vmatpush2.msra.mxu0 0.0
  %1225 = vmatprep.subr.mxu0 0.0
  %1226 = vmatpush2.msra.mxu0 0.0
  %1227 = vmatprep.subr.mxu0 0.0
  %1228 = vmatpush2.msra.mxu0 0.0
  %1229 = vmatprep.subr.mxu0 0.0
  %1230 = vmatpush2.msra.mxu0 0.0
  %1231 = vmatprep.subr.mxu0 0.0
  %1232 = vmatpush2.msra.mxu0 0.0
  %1233 = vmatprep.subr.mxu0 0.0
  %1234 = vmatpush2.msra.mxu0 0.0
  %1235 = vmatprep.subr.mxu0 0.0
  %1236 = vmatpush2.msra.mxu0 0.0
  %1237 = vmatprep.subr.mxu0 0.0
  %1238 = vmatpush2.msra.mxu0 0.0
  %1239 = vmatprep.subr.mxu0 0.0
  %1240 = vmatpush2.msra.mxu0 0.0
  %1241 = vmatprep.subr.mxu0 0.0
  %1242 = vmatpush2.msra.mxu0 0.0
  %1243 = vmatprep.subr.mxu0 0.0
  %1244 = vmatpush2.msra.mxu0 0.0
  %1245 = vmatprep.subr.mxu0 0.0
  %1246 = vmatpush2.msra.mxu0 0.0
  %1247 = vmatprep.subr.mxu0 0.0
  %1248 = vmatpush2.msra.mxu0 0.0
  %1249 = vmatprep.subr.mxu0 0.0
  %1250 = vmatpush2.msra.mxu0 0.0
  %1251 = vmatprep.mubr.f32.mxu0 0.0
  %1252 = vmatmul.mubr.f32.gmra.mxu0 %v1031
  %v1253 = vpop.f32.mrf.mxu0
  %v1254 = vadd.f32 0.0, %v1253
  %v1255 = vpop.f32.mrf.mxu0
  %v1256 = vadd.f32 0.0, %v1255
  %1257 = vdwg.mxu0
  %v1258 = vadd.f32 %v1004, %v1112
  %v1259 = vadd.f32 %v1005, %v1114
  %v1260 = vadd.f32 %v1006, %v1183
  %v1261 = vadd.f32 %v1007, %v1185
  %v1262 = vadd.f32 %v1008, %v1254
  %v1263 = vadd.f32 %v1009, %v1256
  %s1264 = scalar_lea.vmem %s0, 40
  %v1265 = vld [vmem:[%s1264] sm:$0xff]
  %1266 = vrot.lane.b32.xlu0 %v11, 108
  %v1267 = vpop.permute.xlu0 %1266
  %1268 = vrot.lane.b32.xlu0 %v12, 108
  %v1269 = vpop.permute.xlu0 %1268
  %1270 = vrot.lane.b32.xlu0 %v13, 108
  %v1271 = vpop.permute.xlu0 %1270
  %1272 = vrot.lane.b32.xlu0 %v14, 108
  %v1273 = vpop.permute.xlu0 %1272
  %1274 = vrot.lane.b32.xlu0 %v15, 108
  %v1275 = vpop.permute.xlu0 %1274
  %1276 = vrot.lane.b32.xlu0 %v16, 108
  %v1277 = vpop.permute.xlu0 %1276
  %vm1278 = vcmask 883712
  %v1279 = vsel %vm1278, %v1267, %v1269
  %v1280 = vsel %vm1278, %v1269, %v1271
  %v1281 = vsel %vm1278, %v1271, %v1273
  %v1282 = vsel %vm1278, %v1273, %v1275
  %v1283 = vsel %vm1278, %v1275, %v1277
  %v1285 = vsel %vm44, %v1265, 0
  %v1287 = vsel %vm48, %v1279, 0
  %v1289 = vsel %vm48, %v1280, 0
  %v1291 = vsel %vm48, %v1281, 0
  %v1293 = vsel %vm48, %v1282, 0
  %v1295 = vsel %vm48, %v1283, 0
  %v1297 = vsel %vm48, %v1277, 0
  %1299 = vmatprep.subr.mxu0 0.0
  %1300 = vmatpush1.msra.mxu0 0.0
  %1301 = vmatprep.subr.mxu0 0.0
  %1302 = vmatpush1.msra.mxu0 0.0
  %1303 = vmatprep.subr.mxu0 0.0
  %1304 = vmatpush1.msra.mxu0 0.0
  %1305 = vmatprep.subr.mxu0 0.0
  %1306 = vmatpush1.msra.mxu0 0.0
  %1307 = vmatprep.subr.mxu0 0.0
  %1308 = vmatpush1.msra.mxu0 0.0
  %1309 = vmatprep.subr.mxu0 0.0
  %1310 = vmatpush1.msra.mxu0 0.0
  %1311 = vmatprep.subr.mxu0 0.0
  %1312 = vmatpush1.msra.mxu0 0.0
  %1313 = vmatprep.subr.mxu0 0.0
  %1314 = vmatpush1.msra.mxu0 0.0
  %1315 = vmatprep.subr.mxu0 0.0
  %1316 = vmatpush1.msra.mxu0 0.0
  %1317 = vmatprep.subr.mxu0 0.0
  %1318 = vmatpush1.msra.mxu0 0.0
  %1319 = vmatprep.subr.mxu0 0.0
  %1320 = vmatpush1.msra.mxu0 0.0
  %1321 = vmatprep.subr.mxu0 0.0
  %1322 = vmatpush1.msra.mxu0 0.0
  %1323 = vmatprep.subr.mxu0 0.0
  %1324 = vmatpush1.msra.mxu0 0.0
  %1325 = vmatprep.subr.mxu0 0.0
  %1326 = vmatpush1.msra.mxu0 0.0
  %1327 = vmatprep.subr.mxu0 0.0
  %1328 = vmatpush1.msra.mxu0 0.0
  %1329 = vmatprep.subr.mxu0 %v1289
  %1330 = vmatpush1.msra.mxu0 %v1287
  %1331 = vmatprep.subr.mxu0 0.0
  %1332 = vmatpush2.msra.mxu0 0.0
  %1333 = vmatprep.subr.mxu0 0.0
  %1334 = vmatpush2.msra.mxu0 0.0
  %1335 = vmatprep.subr.mxu0 0.0
  %1336 = vmatpush2.msra.mxu0 0.0
  %1337 = vmatprep.subr.mxu0 0.0
  %1338 = vmatpush2.msra.mxu0 0.0
  %1339 = vmatprep.subr.mxu0 0.0
  %1340 = vmatpush2.msra.mxu0 0.0
  %1341 = vmatprep.subr.mxu0 0.0
  %1342 = vmatpush2.msra.mxu0 0.0
  %1343 = vmatprep.subr.mxu0 0.0
  %1344 = vmatpush2.msra.mxu0 0.0
  %1345 = vmatprep.subr.mxu0 0.0
  %1346 = vmatpush2.msra.mxu0 0.0
  %1347 = vmatprep.subr.mxu0 0.0
  %1348 = vmatpush2.msra.mxu0 0.0
  %1349 = vmatprep.subr.mxu0 0.0
  %1350 = vmatpush2.msra.mxu0 0.0
  %1351 = vmatprep.subr.mxu0 0.0
  %1352 = vmatpush2.msra.mxu0 0.0
  %1353 = vmatprep.subr.mxu0 0.0
  %1354 = vmatpush2.msra.mxu0 0.0
  %1355 = vmatprep.subr.mxu0 0.0
  %1356 = vmatpush2.msra.mxu0 0.0
  %1357 = vmatprep.subr.mxu0 0.0
  %1358 = vmatpush2.msra.mxu0 0.0
  %1359 = vmatprep.subr.mxu0 0.0
  %1360 = vmatpush2.msra.mxu0 0.0
  %1361 = vmatprep.subr.mxu0 0.0
  %1362 = vmatpush2.msra.mxu0 0.0
  %1363 = vmatprep.mubr.f32.mxu0 0.0
  %1364 = vmatmul.mubr.f32.gmra.mxu0 %v1285
  %v1365 = vpop.f32.mrf.mxu0
  %v1366 = vadd.f32 0.0, %v1365
  %v1367 = vpop.f32.mrf.mxu0
  %v1368 = vadd.f32 0.0, %v1367
  %1369 = vdwg.mxu0
  %1370 = vmatprep.subr.mxu0 0.0
  %1371 = vmatpush1.msra.mxu0 0.0
  %1372 = vmatprep.subr.mxu0 0.0
  %1373 = vmatpush1.msra.mxu0 0.0
  %1374 = vmatprep.subr.mxu0 0.0
  %1375 = vmatpush1.msra.mxu0 0.0
  %1376 = vmatprep.subr.mxu0 0.0
  %1377 = vmatpush1.msra.mxu0 0.0
  %1378 = vmatprep.subr.mxu0 0.0
  %1379 = vmatpush1.msra.mxu0 0.0
  %1380 = vmatprep.subr.mxu0 0.0
  %1381 = vmatpush1.msra.mxu0 0.0
  %1382 = vmatprep.subr.mxu0 0.0
  %1383 = vmatpush1.msra.mxu0 0.0
  %1384 = vmatprep.subr.mxu0 0.0
  %1385 = vmatpush1.msra.mxu0 0.0
  %1386 = vmatprep.subr.mxu0 0.0
  %1387 = vmatpush1.msra.mxu0 0.0
  %1388 = vmatprep.subr.mxu0 0.0
  %1389 = vmatpush1.msra.mxu0 0.0
  %1390 = vmatprep.subr.mxu0 0.0
  %1391 = vmatpush1.msra.mxu0 0.0
  %1392 = vmatprep.subr.mxu0 0.0
  %1393 = vmatpush1.msra.mxu0 0.0
  %1394 = vmatprep.subr.mxu0 0.0
  %1395 = vmatpush1.msra.mxu0 0.0
  %1396 = vmatprep.subr.mxu0 0.0
  %1397 = vmatpush1.msra.mxu0 0.0
  %1398 = vmatprep.subr.mxu0 0.0
  %1399 = vmatpush1.msra.mxu0 0.0
  %1400 = vmatprep.subr.mxu0 %v1293
  %1401 = vmatpush1.msra.mxu0 %v1291
  %1402 = vmatprep.subr.mxu0 0.0
  %1403 = vmatpush2.msra.mxu0 0.0
  %1404 = vmatprep.subr.mxu0 0.0
  %1405 = vmatpush2.msra.mxu0 0.0
  %1406 = vmatprep.subr.mxu0 0.0
  %1407 = vmatpush2.msra.mxu0 0.0
  %1408 = vmatprep.subr.mxu0 0.0
  %1409 = vmatpush2.msra.mxu0 0.0
  %1410 = vmatprep.subr.mxu0 0.0
  %1411 = vmatpush2.msra.mxu0 0.0
  %1412 = vmatprep.subr.mxu0 0.0
  %1413 = vmatpush2.msra.mxu0 0.0
  %1414 = vmatprep.subr.mxu0 0.0
  %1415 = vmatpush2.msra.mxu0 0.0
  %1416 = vmatprep.subr.mxu0 0.0
  %1417 = vmatpush2.msra.mxu0 0.0
  %1418 = vmatprep.subr.mxu0 0.0
  %1419 = vmatpush2.msra.mxu0 0.0
  %1420 = vmatprep.subr.mxu0 0.0
  %1421 = vmatpush2.msra.mxu0 0.0
  %1422 = vmatprep.subr.mxu0 0.0
  %1423 = vmatpush2.msra.mxu0 0.0
  %1424 = vmatprep.subr.mxu0 0.0
  %1425 = vmatpush2.msra.mxu0 0.0
  %1426 = vmatprep.subr.mxu0 0.0
  %1427 = vmatpush2.msra.mxu0 0.0
  %1428 = vmatprep.subr.mxu0 0.0
  %1429 = vmatpush2.msra.mxu0 0.0
  %1430 = vmatprep.subr.mxu0 0.0
  %1431 = vmatpush2.msra.mxu0 0.0
  %1432 = vmatprep.subr.mxu0 0.0
  %1433 = vmatpush2.msra.mxu0 0.0
  %1434 = vmatprep.mubr.f32.mxu0 0.0
  %1435 = vmatmul.mubr.f32.gmra.mxu0 %v1285
  %v1436 = vpop.f32.mrf.mxu0
  %v1437 = vadd.f32 0.0, %v1436
  %v1438 = vpop.f32.mrf.mxu0
  %v1439 = vadd.f32 0.0, %v1438
  %1440 = vdwg.mxu0
  %1441 = vmatprep.subr.mxu0 0.0
  %1442 = vmatpush1.msra.mxu0 0.0
  %1443 = vmatprep.subr.mxu0 0.0
  %1444 = vmatpush1.msra.mxu0 0.0
  %1445 = vmatprep.subr.mxu0 0.0
  %1446 = vmatpush1.msra.mxu0 0.0
  %1447 = vmatprep.subr.mxu0 0.0
  %1448 = vmatpush1.msra.mxu0 0.0
  %1449 = vmatprep.subr.mxu0 0.0
  %1450 = vmatpush1.msra.mxu0 0.0
  %1451 = vmatprep.subr.mxu0 0.0
  %1452 = vmatpush1.msra.mxu0 0.0
  %1453 = vmatprep.subr.mxu0 0.0
  %1454 = vmatpush1.msra.mxu0 0.0
  %1455 = vmatprep.subr.mxu0 0.0
  %1456 = vmatpush1.msra.mxu0 0.0
  %1457 = vmatprep.subr.mxu0 0.0
  %1458 = vmatpush1.msra.mxu0 0.0
  %1459 = vmatprep.subr.mxu0 0.0
  %1460 = vmatpush1.msra.mxu0 0.0
  %1461 = vmatprep.subr.mxu0 0.0
  %1462 = vmatpush1.msra.mxu0 0.0
  %1463 = vmatprep.subr.mxu0 0.0
  %1464 = vmatpush1.msra.mxu0 0.0
  %1465 = vmatprep.subr.mxu0 0.0
  %1466 = vmatpush1.msra.mxu0 0.0
  %1467 = vmatprep.subr.mxu0 0.0
  %1468 = vmatpush1.msra.mxu0 0.0
  %1469 = vmatprep.subr.mxu0 0.0
  %1470 = vmatpush1.msra.mxu0 0.0
  %1471 = vmatprep.subr.mxu0 %v1297
  %1472 = vmatpush1.msra.mxu0 %v1295
  %1473 = vmatprep.subr.mxu0 0.0
  %1474 = vmatpush2.msra.mxu0 0.0
  %1475 = vmatprep.subr.mxu0 0.0
  %1476 = vmatpush2.msra.mxu0 0.0
  %1477 = vmatprep.subr.mxu0 0.0
  %1478 = vmatpush2.msra.mxu0 0.0
  %1479 = vmatprep.subr.mxu0 0.0
  %1480 = vmatpush2.msra.mxu0 0.0
  %1481 = vmatprep.subr.mxu0 0.0
  %1482 = vmatpush2.msra.mxu0 0.0
  %1483 = vmatprep.subr.mxu0 0.0
  %1484 = vmatpush2.msra.mxu0 0.0
  %1485 = vmatprep.subr.mxu0 0.0
  %1486 = vmatpush2.msra.mxu0 0.0
  %1487 = vmatprep.subr.mxu0 0.0
  %1488 = vmatpush2.msra.mxu0 0.0
  %1489 = vmatprep.subr.mxu0 0.0
  %1490 = vmatpush2.msra.mxu0 0.0
  %1491 = vmatprep.subr.mxu0 0.0
  %1492 = vmatpush2.msra.mxu0 0.0
  %1493 = vmatprep.subr.mxu0 0.0
  %1494 = vmatpush2.msra.mxu0 0.0
  %1495 = vmatprep.subr.mxu0 0.0
  %1496 = vmatpush2.msra.mxu0 0.0
  %1497 = vmatprep.subr.mxu0 0.0
  %1498 = vmatpush2.msra.mxu0 0.0
  %1499 = vmatprep.subr.mxu0 0.0
  %1500 = vmatpush2.msra.mxu0 0.0
  %1501 = vmatprep.subr.mxu0 0.0
  %1502 = vmatpush2.msra.mxu0 0.0
  %1503 = vmatprep.subr.mxu0 0.0
  %1504 = vmatpush2.msra.mxu0 0.0
  %1505 = vmatprep.mubr.f32.mxu0 0.0
  %1506 = vmatmul.mubr.f32.gmra.mxu0 %v1285
  %v1507 = vpop.f32.mrf.mxu0
  %v1508 = vadd.f32 0.0, %v1507
  %v1509 = vpop.f32.mrf.mxu0
  %v1510 = vadd.f32 0.0, %v1509
  %1511 = vdwg.mxu0
  %v1512 = vadd.f32 %v1258, %v1366
  %v1513 = vadd.f32 %v1259, %v1368
  %v1514 = vadd.f32 %v1260, %v1437
  %v1515 = vadd.f32 %v1261, %v1439
  %v1516 = vadd.f32 %v1262, %v1508
  %v1517 = vadd.f32 %v1263, %v1510
  %s1518 = scalar_lea.vmem %s0, 48
  %v1519 = vld [vmem:[%s1518] sm:$0xff]
  %1520 = vrot.lane.b32.xlu0 %v11, 92
  %v1521 = vpop.permute.xlu0 %1520
  %1522 = vrot.lane.b32.xlu0 %v12, 92
  %v1523 = vpop.permute.xlu0 %1522
  %1524 = vrot.lane.b32.xlu0 %v13, 92
  %v1525 = vpop.permute.xlu0 %1524
  %1526 = vrot.lane.b32.xlu0 %v14, 92
  %v1527 = vpop.permute.xlu0 %1526
  %1528 = vrot.lane.b32.xlu0 %v15, 92
  %v1529 = vpop.permute.xlu0 %1528
  %1530 = vrot.lane.b32.xlu0 %v16, 92
  %v1531 = vpop.permute.xlu0 %1530
  %vm1532 = vcmask 752640
  %v1533 = vsel %vm1532, %v1521, %v1523
  %v1534 = vsel %vm1532, %v1523, %v1525
  %v1535 = vsel %vm1532, %v1525, %v1527
  %v1536 = vsel %vm1532, %v1527, %v1529
  %v1537 = vsel %vm1532, %v1529, %v1531
  %v1539 = vsel %vm44, %v1519, 0
  %v1541 = vsel %vm48, %v1533, 0
  %v1543 = vsel %vm48, %v1534, 0
  %v1545 = vsel %vm48, %v1535, 0
  %v1547 = vsel %vm48, %v1536, 0
  %v1549 = vsel %vm48, %v1537, 0
  %v1551 = vsel %vm48, %v1531, 0
  %1553 = vmatprep.subr.mxu0 0.0
  %1554 = vmatpush1.msra.mxu0 0.0
  %1555 = vmatprep.subr.mxu0 0.0
  %1556 = vmatpush1.msra.mxu0 0.0
  %1557 = vmatprep.subr.mxu0 0.0
  %1558 = vmatpush1.msra.mxu0 0.0
  %1559 = vmatprep.subr.mxu0 0.0
  %1560 = vmatpush1.msra.mxu0 0.0
  %1561 = vmatprep.subr.mxu0 0.0
  %1562 = vmatpush1.msra.mxu0 0.0
  %1563 = vmatprep.subr.mxu0 0.0
  %1564 = vmatpush1.msra.mxu0 0.0
  %1565 = vmatprep.subr.mxu0 0.0
  %1566 = vmatpush1.msra.mxu0 0.0
  %1567 = vmatprep.subr.mxu0 0.0
  %1568 = vmatpush1.msra.mxu0 0.0
  %1569 = vmatprep.subr.mxu0 0.0
  %1570 = vmatpush1.msra.mxu0 0.0
  %1571 = vmatprep.subr.mxu0 0.0
  %1572 = vmatpush1.msra.mxu0 0.0
  %1573 = vmatprep.subr.mxu0 0.0
  %1574 = vmatpush1.msra.mxu0 0.0
  %1575 = vmatprep.subr.mxu0 0.0
  %1576 = vmatpush1.msra.mxu0 0.0
  %1577 = vmatprep.subr.mxu0 0.0
  %1578 = vmatpush1.msra.mxu0 0.0
  %1579 = vmatprep.subr.mxu0 0.0
  %1580 = vmatpush1.msra.mxu0 0.0
  %1581 = vmatprep.subr.mxu0 0.0
  %1582 = vmatpush1.msra.mxu0 0.0
  %1583 = vmatprep.subr.mxu0 %v1543
  %1584 = vmatpush1.msra.mxu0 %v1541
  %1585 = vmatprep.subr.mxu0 0.0
  %1586 = vmatpush2.msra.mxu0 0.0
  %1587 = vmatprep.subr.mxu0 0.0
  %1588 = vmatpush2.msra.mxu0 0.0
  %1589 = vmatprep.subr.mxu0 0.0
  %1590 = vmatpush2.msra.mxu0 0.0
  %1591 = vmatprep.subr.mxu0 0.0
  %1592 = vmatpush2.msra.mxu0 0.0
  %1593 = vmatprep.subr.mxu0 0.0
  %1594 = vmatpush2.msra.mxu0 0.0
  %1595 = vmatprep.subr.mxu0 0.0
  %1596 = vmatpush2.msra.mxu0 0.0
  %1597 = vmatprep.subr.mxu0 0.0
  %1598 = vmatpush2.msra.mxu0 0.0
  %1599 = vmatprep.subr.mxu0 0.0
  %1600 = vmatpush2.msra.mxu0 0.0
  %1601 = vmatprep.subr.mxu0 0.0
  %1602 = vmatpush2.msra.mxu0 0.0
  %1603 = vmatprep.subr.mxu0 0.0
  %1604 = vmatpush2.msra.mxu0 0.0
  %1605 = vmatprep.subr.mxu0 0.0
  %1606 = vmatpush2.msra.mxu0 0.0
  %1607 = vmatprep.subr.mxu0 0.0
  %1608 = vmatpush2.msra.mxu0 0.0
  %1609 = vmatprep.subr.mxu0 0.0
  %1610 = vmatpush2.msra.mxu0 0.0
  %1611 = vmatprep.subr.mxu0 0.0
  %1612 = vmatpush2.msra.mxu0 0.0
  %1613 = vmatprep.subr.mxu0 0.0
  %1614 = vmatpush2.msra.mxu0 0.0
  %1615 = vmatprep.subr.mxu0 0.0
  %1616 = vmatpush2.msra.mxu0 0.0
  %1617 = vmatprep.mubr.f32.mxu0 0.0
  %1618 = vmatmul.mubr.f32.gmra.mxu0 %v1539
  %v1619 = vpop.f32.mrf.mxu0
  %v1620 = vadd.f32 0.0, %v1619
  %v1621 = vpop.f32.mrf.mxu0
  %v1622 = vadd.f32 0.0, %v1621
  %1623 = vdwg.mxu0
  %1624 = vmatprep.subr.mxu0 0.0
  %1625 = vmatpush1.msra.mxu0 0.0
  %1626 = vmatprep.subr.mxu0 0.0
  %1627 = vmatpush1.msra.mxu0 0.0
  %1628 = vmatprep.subr.mxu0 0.0
  %1629 = vmatpush1.msra.mxu0 0.0
  %1630 = vmatprep.subr.mxu0 0.0
  %1631 = vmatpush1.msra.mxu0 0.0
  %1632 = vmatprep.subr.mxu0 0.0
  %1633 = vmatpush1.msra.mxu0 0.0
  %1634 = vmatprep.subr.mxu0 0.0
  %1635 = vmatpush1.msra.mxu0 0.0
  %1636 = vmatprep.subr.mxu0 0.0
  %1637 = vmatpush1.msra.mxu0 0.0
  %1638 = vmatprep.subr.mxu0 0.0
  %1639 = vmatpush1.msra.mxu0 0.0
  %1640 = vmatprep.subr.mxu0 0.0
  %1641 = vmatpush1.msra.mxu0 0.0
  %1642 = vmatprep.subr.mxu0 0.0
  %1643 = vmatpush1.msra.mxu0 0.0
  %1644 = vmatprep.subr.mxu0 0.0
  %1645 = vmatpush1.msra.mxu0 0.0
  %1646 = vmatprep.subr.mxu0 0.0
  %1647 = vmatpush1.msra.mxu0 0.0
  %1648 = vmatprep.subr.mxu0 0.0
  %1649 = vmatpush1.msra.mxu0 0.0
  %1650 = vmatprep.subr.mxu0 0.0
  %1651 = vmatpush1.msra.mxu0 0.0
  %1652 = vmatprep.subr.mxu0 0.0
  %1653 = vmatpush1.msra.mxu0 0.0
  %1654 = vmatprep.subr.mxu0 %v1547
  %1655 = vmatpush1.msra.mxu0 %v1545
  %1656 = vmatprep.subr.mxu0 0.0
  %1657 = vmatpush2.msra.mxu0 0.0
  %1658 = vmatprep.subr.mxu0 0.0
  %1659 = vmatpush2.msra.mxu0 0.0
  %1660 = vmatprep.subr.mxu0 0.0
  %1661 = vmatpush2.msra.mxu0 0.0
  %1662 = vmatprep.subr.mxu0 0.0
  %1663 = vmatpush2.msra.mxu0 0.0
  %1664 = vmatprep.subr.mxu0 0.0
  %1665 = vmatpush2.msra.mxu0 0.0
  %1666 = vmatprep.subr.mxu0 0.0
  %1667 = vmatpush2.msra.mxu0 0.0
  %1668 = vmatprep.subr.mxu0 0.0
  %1669 = vmatpush2.msra.mxu0 0.0
  %1670 = vmatprep.subr.mxu0 0.0
  %1671 = vmatpush2.msra.mxu0 0.0
  %1672 = vmatprep.subr.mxu0 0.0
  %1673 = vmatpush2.msra.mxu0 0.0
  %1674 = vmatprep.subr.mxu0 0.0
  %1675 = vmatpush2.msra.mxu0 0.0
  %1676 = vmatprep.subr.mxu0 0.0
  %1677 = vmatpush2.msra.mxu0 0.0
  %1678 = vmatprep.subr.mxu0 0.0
  %1679 = vmatpush2.msra.mxu0 0.0
  %1680 = vmatprep.subr.mxu0 0.0
  %1681 = vmatpush2.msra.mxu0 0.0
  %1682 = vmatprep.subr.mxu0 0.0
  %1683 = vmatpush2.msra.mxu0 0.0
  %1684 = vmatprep.subr.mxu0 0.0
  %1685 = vmatpush2.msra.mxu0 0.0
  %1686 = vmatprep.subr.mxu0 0.0
  %1687 = vmatpush2.msra.mxu0 0.0
  %1688 = vmatprep.mubr.f32.mxu0 0.0
  %1689 = vmatmul.mubr.f32.gmra.mxu0 %v1539
  %v1690 = vpop.f32.mrf.mxu0
  %v1691 = vadd.f32 0.0, %v1690
  %v1692 = vpop.f32.mrf.mxu0
  %v1693 = vadd.f32 0.0, %v1692
  %1694 = vdwg.mxu0
  %1695 = vmatprep.subr.mxu0 0.0
  %1696 = vmatpush1.msra.mxu0 0.0
  %1697 = vmatprep.subr.mxu0 0.0
  %1698 = vmatpush1.msra.mxu0 0.0
  %1699 = vmatprep.subr.mxu0 0.0
  %1700 = vmatpush1.msra.mxu0 0.0
  %1701 = vmatprep.subr.mxu0 0.0
  %1702 = vmatpush1.msra.mxu0 0.0
  %1703 = vmatprep.subr.mxu0 0.0
  %1704 = vmatpush1.msra.mxu0 0.0
  %1705 = vmatprep.subr.mxu0 0.0
  %1706 = vmatpush1.msra.mxu0 0.0
  %1707 = vmatprep.subr.mxu0 0.0
  %1708 = vmatpush1.msra.mxu0 0.0
  %1709 = vmatprep.subr.mxu0 0.0
  %1710 = vmatpush1.msra.mxu0 0.0
  %1711 = vmatprep.subr.mxu0 0.0
  %1712 = vmatpush1.msra.mxu0 0.0
  %1713 = vmatprep.subr.mxu0 0.0
  %1714 = vmatpush1.msra.mxu0 0.0
  %1715 = vmatprep.subr.mxu0 0.0
  %1716 = vmatpush1.msra.mxu0 0.0
  %1717 = vmatprep.subr.mxu0 0.0
  %1718 = vmatpush1.msra.mxu0 0.0
  %1719 = vmatprep.subr.mxu0 0.0
  %1720 = vmatpush1.msra.mxu0 0.0
  %1721 = vmatprep.subr.mxu0 0.0
  %1722 = vmatpush1.msra.mxu0 0.0
  %1723 = vmatprep.subr.mxu0 0.0
  %1724 = vmatpush1.msra.mxu0 0.0
  %1725 = vmatprep.subr.mxu0 %v1551
  %1726 = vmatpush1.msra.mxu0 %v1549
  %1727 = vmatprep.subr.mxu0 0.0
  %1728 = vmatpush2.msra.mxu0 0.0
  %1729 = vmatprep.subr.mxu0 0.0
  %1730 = vmatpush2.msra.mxu0 0.0
  %1731 = vmatprep.subr.mxu0 0.0
  %1732 = vmatpush2.msra.mxu0 0.0
  %1733 = vmatprep.subr.mxu0 0.0
  %1734 = vmatpush2.msra.mxu0 0.0
  %1735 = vmatprep.subr.mxu0 0.0
  %1736 = vmatpush2.msra.mxu0 0.0
  %1737 = vmatprep.subr.mxu0 0.0
  %1738 = vmatpush2.msra.mxu0 0.0
  %1739 = vmatprep.subr.mxu0 0.0
  %1740 = vmatpush2.msra.mxu0 0.0
  %1741 = vmatprep.subr.mxu0 0.0
  %1742 = vmatpush2.msra.mxu0 0.0
  %1743 = vmatprep.subr.mxu0 0.0
  %1744 = vmatpush2.msra.mxu0 0.0
  %1745 = vmatprep.subr.mxu0 0.0
  %1746 = vmatpush2.msra.mxu0 0.0
  %1747 = vmatprep.subr.mxu0 0.0
  %1748 = vmatpush2.msra.mxu0 0.0
  %1749 = vmatprep.subr.mxu0 0.0
  %1750 = vmatpush2.msra.mxu0 0.0
  %1751 = vmatprep.subr.mxu0 0.0
  %1752 = vmatpush2.msra.mxu0 0.0
  %1753 = vmatprep.subr.mxu0 0.0
  %1754 = vmatpush2.msra.mxu0 0.0
  %1755 = vmatprep.subr.mxu0 0.0
  %1756 = vmatpush2.msra.mxu0 0.0
  %1757 = vmatprep.subr.mxu0 0.0
  %1758 = vmatpush2.msra.mxu0 0.0
  %1759 = vmatprep.mubr.f32.mxu0 0.0
  %1760 = vmatmul.mubr.f32.gmra.mxu0 %v1539
  %v1761 = vpop.f32.mrf.mxu0
  %v1762 = vadd.f32 0.0, %v1761
  %v1763 = vpop.f32.mrf.mxu0
  %v1764 = vadd.f32 0.0, %v1763
  %1765 = vdwg.mxu0
  %v1766 = vadd.f32 %v1512, %v1620
  %v1767 = vadd.f32 %v1513, %v1622
  %v1768 = vadd.f32 %v1514, %v1691
  %v1769 = vadd.f32 %v1515, %v1693
  %v1770 = vadd.f32 %v1516, %v1762
  %v1771 = vadd.f32 %v1517, %v1764
  %s1772 = scalar_lea.vmem %s0, 56
  %v1773 = vld [vmem:[%s1772] sm:$0xff]
  %1774 = vrot.lane.b32.xlu0 %v11, 91
  %v1775 = vpop.permute.xlu0 %1774
  %1776 = vrot.lane.b32.xlu0 %v12, 91
  %v1777 = vpop.permute.xlu0 %1776
  %1778 = vrot.lane.b32.xlu0 %v13, 91
  %v1779 = vpop.permute.xlu0 %1778
  %1780 = vrot.lane.b32.xlu0 %v14, 91
  %v1781 = vpop.permute.xlu0 %1780
  %1782 = vrot.lane.b32.xlu0 %v15, 91
  %v1783 = vpop.permute.xlu0 %1782
  %1784 = vrot.lane.b32.xlu0 %v16, 91
  %v1785 = vpop.permute.xlu0 %1784
  %vm1786 = vcmask 744448
  %v1787 = vsel %vm1786, %v1775, %v1777
  %v1788 = vsel %vm1786, %v1777, %v1779
  %v1789 = vsel %vm1786, %v1779, %v1781
  %v1790 = vsel %vm1786, %v1781, %v1783
  %v1791 = vsel %vm1786, %v1783, %v1785
  %v1793 = vsel %vm44, %v1773, 0
  %v1795 = vsel %vm48, %v1787, 0
  %v1797 = vsel %vm48, %v1788, 0
  %v1799 = vsel %vm48, %v1789, 0
  %v1801 = vsel %vm48, %v1790, 0
  %v1803 = vsel %vm48, %v1791, 0
  %v1805 = vsel %vm48, %v1785, 0
  %1807 = vmatprep.subr.mxu0 0.0
  %1808 = vmatpush1.msra.mxu0 0.0
  %1809 = vmatprep.subr.mxu0 0.0
  %1810 = vmatpush1.msra.mxu0 0.0
  %1811 = vmatprep.subr.mxu0 0.0
  %1812 = vmatpush1.msra.mxu0 0.0
  %1813 = vmatprep.subr.mxu0 0.0
  %1814 = vmatpush1.msra.mxu0 0.0
  %1815 = vmatprep.subr.mxu0 0.0
  %1816 = vmatpush1.msra.mxu0 0.0
  %1817 = vmatprep.subr.mxu0 0.0
  %1818 = vmatpush1.msra.mxu0 0.0
  %1819 = vmatprep.subr.mxu0 0.0
  %1820 = vmatpush1.msra.mxu0 0.0
  %1821 = vmatprep.subr.mxu0 0.0
  %1822 = vmatpush1.msra.mxu0 0.0
  %1823 = vmatprep.subr.mxu0 0.0
  %1824 = vmatpush1.msra.mxu0 0.0
  %1825 = vmatprep.subr.mxu0 0.0
  %1826 = vmatpush1.msra.mxu0 0.0
  %1827 = vmatprep.subr.mxu0 0.0
  %1828 = vmatpush1.msra.mxu0 0.0
  %1829 = vmatprep.subr.mxu0 0.0
  %1830 = vmatpush1.msra.mxu0 0.0
  %1831 = vmatprep.subr.mxu0 0.0
  %1832 = vmatpush1.msra.mxu0 0.0
  %1833 = vmatprep.subr.mxu0 0.0
  %1834 = vmatpush1.msra.mxu0 0.0
  %1835 = vmatprep.subr.mxu0 0.0
  %1836 = vmatpush1.msra.mxu0 0.0
  %1837 = vmatprep.subr.mxu0 %v1797
  %1838 = vmatpush1.msra.mxu0 %v1795
  %1839 = vmatprep.subr.mxu0 0.0
  %1840 = vmatpush2.msra.mxu0 0.0
  %1841 = vmatprep.subr.mxu0 0.0
  %1842 = vmatpush2.msra.mxu0 0.0
  %1843 = vmatprep.subr.mxu0 0.0
  %1844 = vmatpush2.msra.mxu0 0.0
  %1845 = vmatprep.subr.mxu0 0.0
  %1846 = vmatpush2.msra.mxu0 0.0
  %1847 = vmatprep.subr.mxu0 0.0
  %1848 = vmatpush2.msra.mxu0 0.0
  %1849 = vmatprep.subr.mxu0 0.0
  %1850 = vmatpush2.msra.mxu0 0.0
  %1851 = vmatprep.subr.mxu0 0.0
  %1852 = vmatpush2.msra.mxu0 0.0
  %1853 = vmatprep.subr.mxu0 0.0
  %1854 = vmatpush2.msra.mxu0 0.0
  %1855 = vmatprep.subr.mxu0 0.0
  %1856 = vmatpush2.msra.mxu0 0.0
  %1857 = vmatprep.subr.mxu0 0.0
  %1858 = vmatpush2.msra.mxu0 0.0
  %1859 = vmatprep.subr.mxu0 0.0
  %1860 = vmatpush2.msra.mxu0 0.0
  %1861 = vmatprep.subr.mxu0 0.0
  %1862 = vmatpush2.msra.mxu0 0.0
  %1863 = vmatprep.subr.mxu0 0.0
  %1864 = vmatpush2.msra.mxu0 0.0
  %1865 = vmatprep.subr.mxu0 0.0
  %1866 = vmatpush2.msra.mxu0 0.0
  %1867 = vmatprep.subr.mxu0 0.0
  %1868 = vmatpush2.msra.mxu0 0.0
  %1869 = vmatprep.subr.mxu0 0.0
  %1870 = vmatpush2.msra.mxu0 0.0
  %1871 = vmatprep.mubr.f32.mxu0 0.0
  %1872 = vmatmul.mubr.f32.gmra.mxu0 %v1793
  %v1873 = vpop.f32.mrf.mxu0
  %v1874 = vadd.f32 0.0, %v1873
  %v1875 = vpop.f32.mrf.mxu0
  %v1876 = vadd.f32 0.0, %v1875
  %1877 = vdwg.mxu0
  %1878 = vmatprep.subr.mxu0 0.0
  %1879 = vmatpush1.msra.mxu0 0.0
  %1880 = vmatprep.subr.mxu0 0.0
  %1881 = vmatpush1.msra.mxu0 0.0
  %1882 = vmatprep.subr.mxu0 0.0
  %1883 = vmatpush1.msra.mxu0 0.0
  %1884 = vmatprep.subr.mxu0 0.0
  %1885 = vmatpush1.msra.mxu0 0.0
  %1886 = vmatprep.subr.mxu0 0.0
  %1887 = vmatpush1.msra.mxu0 0.0
  %1888 = vmatprep.subr.mxu0 0.0
  %1889 = vmatpush1.msra.mxu0 0.0
  %1890 = vmatprep.subr.mxu0 0.0
  %1891 = vmatpush1.msra.mxu0 0.0
  %1892 = vmatprep.subr.mxu0 0.0
  %1893 = vmatpush1.msra.mxu0 0.0
  %1894 = vmatprep.subr.mxu0 0.0
  %1895 = vmatpush1.msra.mxu0 0.0
  %1896 = vmatprep.subr.mxu0 0.0
  %1897 = vmatpush1.msra.mxu0 0.0
  %1898 = vmatprep.subr.mxu0 0.0
  %1899 = vmatpush1.msra.mxu0 0.0
  %1900 = vmatprep.subr.mxu0 0.0
  %1901 = vmatpush1.msra.mxu0 0.0
  %1902 = vmatprep.subr.mxu0 0.0
  %1903 = vmatpush1.msra.mxu0 0.0
  %1904 = vmatprep.subr.mxu0 0.0
  %1905 = vmatpush1.msra.mxu0 0.0
  %1906 = vmatprep.subr.mxu0 0.0
  %1907 = vmatpush1.msra.mxu0 0.0
  %1908 = vmatprep.subr.mxu0 %v1801
  %1909 = vmatpush1.msra.mxu0 %v1799
  %1910 = vmatprep.subr.mxu0 0.0
  %1911 = vmatpush2.msra.mxu0 0.0
  %1912 = vmatprep.subr.mxu0 0.0
  %1913 = vmatpush2.msra.mxu0 0.0
  %1914 = vmatprep.subr.mxu0 0.0
  %1915 = vmatpush2.msra.mxu0 0.0
  %1916 = vmatprep.subr.mxu0 0.0
  %1917 = vmatpush2.msra.mxu0 0.0
  %1918 = vmatprep.subr.mxu0 0.0
  %1919 = vmatpush2.msra.mxu0 0.0
  %1920 = vmatprep.subr.mxu0 0.0
  %1921 = vmatpush2.msra.mxu0 0.0
  %1922 = vmatprep.subr.mxu0 0.0
  %1923 = vmatpush2.msra.mxu0 0.0
  %1924 = vmatprep.subr.mxu0 0.0
  %1925 = vmatpush2.msra.mxu0 0.0
  %1926 = vmatprep.subr.mxu0 0.0
  %1927 = vmatpush2.msra.mxu0 0.0
  %1928 = vmatprep.subr.mxu0 0.0
  %1929 = vmatpush2.msra.mxu0 0.0
  %1930 = vmatprep.subr.mxu0 0.0
  %1931 = vmatpush2.msra.mxu0 0.0
  %1932 = vmatprep.subr.mxu0 0.0
  %1933 = vmatpush2.msra.mxu0 0.0
  %1934 = vmatprep.subr.mxu0 0.0
  %1935 = vmatpush2.msra.mxu0 0.0
  %1936 = vmatprep.subr.mxu0 0.0
  %1937 = vmatpush2.msra.mxu0 0.0
  %1938 = vmatprep.subr.mxu0 0.0
  %1939 = vmatpush2.msra.mxu0 0.0
  %1940 = vmatprep.subr.mxu0 0.0
  %1941 = vmatpush2.msra.mxu0 0.0
  %1942 = vmatprep.mubr.f32.mxu0 0.0
  %1943 = vmatmul.mubr.f32.gmra.mxu0 %v1793
  %v1944 = vpop.f32.mrf.mxu0
  %v1945 = vadd.f32 0.0, %v1944
  %v1946 = vpop.f32.mrf.mxu0
  %v1947 = vadd.f32 0.0, %v1946
  %1948 = vdwg.mxu0
  %1949 = vmatprep.subr.mxu0 0.0
  %1950 = vmatpush1.msra.mxu0 0.0
  %1951 = vmatprep.subr.mxu0 0.0
  %1952 = vmatpush1.msra.mxu0 0.0
  %1953 = vmatprep.subr.mxu0 0.0
  %1954 = vmatpush1.msra.mxu0 0.0
  %1955 = vmatprep.subr.mxu0 0.0
  %1956 = vmatpush1.msra.mxu0 0.0
  %1957 = vmatprep.subr.mxu0 0.0
  %1958 = vmatpush1.msra.mxu0 0.0
  %1959 = vmatprep.subr.mxu0 0.0
  %1960 = vmatpush1.msra.mxu0 0.0
  %1961 = vmatprep.subr.mxu0 0.0
  %1962 = vmatpush1.msra.mxu0 0.0
  %1963 = vmatprep.subr.mxu0 0.0
  %1964 = vmatpush1.msra.mxu0 0.0
  %1965 = vmatprep.subr.mxu0 0.0
  %1966 = vmatpush1.msra.mxu0 0.0
  %1967 = vmatprep.subr.mxu0 0.0
  %1968 = vmatpush1.msra.mxu0 0.0
  %1969 = vmatprep.subr.mxu0 0.0
  %1970 = vmatpush1.msra.mxu0 0.0
  %1971 = vmatprep.subr.mxu0 0.0
  %1972 = vmatpush1.msra.mxu0 0.0
  %1973 = vmatprep.subr.mxu0 0.0
  %1974 = vmatpush1.msra.mxu0 0.0
  %1975 = vmatprep.subr.mxu0 0.0
  %1976 = vmatpush1.msra.mxu0 0.0
  %1977 = vmatprep.subr.mxu0 0.0
  %1978 = vmatpush1.msra.mxu0 0.0
  %1979 = vmatprep.subr.mxu0 %v1805
  %1980 = vmatpush1.msra.mxu0 %v1803
  %1981 = vmatprep.subr.mxu0 0.0
  %1982 = vmatpush2.msra.mxu0 0.0
  %1983 = vmatprep.subr.mxu0 0.0
  %1984 = vmatpush2.msra.mxu0 0.0
  %1985 = vmatprep.subr.mxu0 0.0
  %1986 = vmatpush2.msra.mxu0 0.0
  %1987 = vmatprep.subr.mxu0 0.0
  %1988 = vmatpush2.msra.mxu0 0.0
  %1989 = vmatprep.subr.mxu0 0.0
  %1990 = vmatpush2.msra.mxu0 0.0
  %1991 = vmatprep.subr.mxu0 0.0
  %1992 = vmatpush2.msra.mxu0 0.0
  %1993 = vmatprep.subr.mxu0 0.0
  %1994 = vmatpush2.msra.mxu0 0.0
  %1995 = vmatprep.subr.mxu0 0.0
  %1996 = vmatpush2.msra.mxu0 0.0
  %1997 = vmatprep.subr.mxu0 0.0
  %1998 = vmatpush2.msra.mxu0 0.0
  %1999 = vmatprep.subr.mxu0 0.0
  %2000 = vmatpush2.msra.mxu0 0.0
  %2001 = vmatprep.subr.mxu0 0.0
  %2002 = vmatpush2.msra.mxu0 0.0
  %2003 = vmatprep.subr.mxu0 0.0
  %2004 = vmatpush2.msra.mxu0 0.0
  %2005 = vmatprep.subr.mxu0 0.0
  %2006 = vmatpush2.msra.mxu0 0.0
  %2007 = vmatprep.subr.mxu0 0.0
  %2008 = vmatpush2.msra.mxu0 0.0
  %2009 = vmatprep.subr.mxu0 0.0
  %2010 = vmatpush2.msra.mxu0 0.0
  %2011 = vmatprep.subr.mxu0 0.0
  %2012 = vmatpush2.msra.mxu0 0.0
  %2013 = vmatprep.mubr.f32.mxu0 0.0
  %2014 = vmatmul.mubr.f32.gmra.mxu0 %v1793
  %v2015 = vpop.f32.mrf.mxu0
  %v2016 = vadd.f32 0.0, %v2015
  %v2017 = vpop.f32.mrf.mxu0
  %v2018 = vadd.f32 0.0, %v2017
  %2019 = vdwg.mxu0
  %v2020 = vadd.f32 %v1766, %v1874
  %v2021 = vadd.f32 %v1767, %v1876
  %v2022 = vadd.f32 %v1768, %v1945
  %v2023 = vadd.f32 %v1769, %v1947
  %v2024 = vadd.f32 %v1770, %v2016
  %v2025 = vadd.f32 %v1771, %v2018
  %s2026 = scalar_lea.vmem %s0, 64
  %v2027 = vld [vmem:[%s2026] sm:$0xff]
  %2028 = vrot.lane.b32.xlu0 %v11, 90
  %v2029 = vpop.permute.xlu0 %2028
  %2030 = vrot.lane.b32.xlu0 %v12, 90
  %v2031 = vpop.permute.xlu0 %2030
  %2032 = vrot.lane.b32.xlu0 %v13, 90
  %v2033 = vpop.permute.xlu0 %2032
  %2034 = vrot.lane.b32.xlu0 %v14, 90
  %v2035 = vpop.permute.xlu0 %2034
  %2036 = vrot.lane.b32.xlu0 %v15, 90
  %v2037 = vpop.permute.xlu0 %2036
  %2038 = vrot.lane.b32.xlu0 %v16, 90
  %v2039 = vpop.permute.xlu0 %2038
  %vm2040 = vcmask 736256
  %v2041 = vsel %vm2040, %v2029, %v2031
  %v2042 = vsel %vm2040, %v2031, %v2033
  %v2043 = vsel %vm2040, %v2033, %v2035
  %v2044 = vsel %vm2040, %v2035, %v2037
  %v2045 = vsel %vm2040, %v2037, %v2039
  %v2047 = vsel %vm44, %v2027, 0
  %v2049 = vsel %vm48, %v2041, 0
  %v2051 = vsel %vm48, %v2042, 0
  %v2053 = vsel %vm48, %v2043, 0
  %v2055 = vsel %vm48, %v2044, 0
  %v2057 = vsel %vm48, %v2045, 0
  %v2059 = vsel %vm48, %v2039, 0
  %2061 = vmatprep.subr.mxu0 0.0
  %2062 = vmatpush1.msra.mxu0 0.0
  %2063 = vmatprep.subr.mxu0 0.0
  %2064 = vmatpush1.msra.mxu0 0.0
  %2065 = vmatprep.subr.mxu0 0.0
  %2066 = vmatpush1.msra.mxu0 0.0
  %2067 = vmatprep.subr.mxu0 0.0
  %2068 = vmatpush1.msra.mxu0 0.0
  %2069 = vmatprep.subr.mxu0 0.0
  %2070 = vmatpush1.msra.mxu0 0.0
  %2071 = vmatprep.subr.mxu0 0.0
  %2072 = vmatpush1.msra.mxu0 0.0
  %2073 = vmatprep.subr.mxu0 0.0
  %2074 = vmatpush1.msra.mxu0 0.0
  %2075 = vmatprep.subr.mxu0 0.0
  %2076 = vmatpush1.msra.mxu0 0.0
  %2077 = vmatprep.subr.mxu0 0.0
  %2078 = vmatpush1.msra.mxu0 0.0
  %2079 = vmatprep.subr.mxu0 0.0
  %2080 = vmatpush1.msra.mxu0 0.0
  %2081 = vmatprep.subr.mxu0 0.0
  %2082 = vmatpush1.msra.mxu0 0.0
  %2083 = vmatprep.subr.mxu0 0.0
  %2084 = vmatpush1.msra.mxu0 0.0
  %2085 = vmatprep.subr.mxu0 0.0
  %2086 = vmatpush1.msra.mxu0 0.0
  %2087 = vmatprep.subr.mxu0 0.0
  %2088 = vmatpush1.msra.mxu0 0.0
  %2089 = vmatprep.subr.mxu0 0.0
  %2090 = vmatpush1.msra.mxu0 0.0
  %2091 = vmatprep.subr.mxu0 %v2051
  %2092 = vmatpush1.msra.mxu0 %v2049
  %2093 = vmatprep.subr.mxu0 0.0
  %2094 = vmatpush2.msra.mxu0 0.0
  %2095 = vmatprep.subr.mxu0 0.0
  %2096 = vmatpush2.msra.mxu0 0.0
  %2097 = vmatprep.subr.mxu0 0.0
  %2098 = vmatpush2.msra.mxu0 0.0
  %2099 = vmatprep.subr.mxu0 0.0
  %2100 = vmatpush2.msra.mxu0 0.0
  %2101 = vmatprep.subr.mxu0 0.0
  %2102 = vmatpush2.msra.mxu0 0.0
  %2103 = vmatprep.subr.mxu0 0.0
  %2104 = vmatpush2.msra.mxu0 0.0
  %2105 = vmatprep.subr.mxu0 0.0
  %2106 = vmatpush2.msra.mxu0 0.0
  %2107 = vmatprep.subr.mxu0 0.0
  %2108 = vmatpush2.msra.mxu0 0.0
  %2109 = vmatprep.subr.mxu0 0.0
  %2110 = vmatpush2.msra.mxu0 0.0
  %2111 = vmatprep.subr.mxu0 0.0
  %2112 = vmatpush2.msra.mxu0 0.0
  %2113 = vmatprep.subr.mxu0 0.0
  %2114 = vmatpush2.msra.mxu0 0.0
  %2115 = vmatprep.subr.mxu0 0.0
  %2116 = vmatpush2.msra.mxu0 0.0
  %2117 = vmatprep.subr.mxu0 0.0
  %2118 = vmatpush2.msra.mxu0 0.0
  %2119 = vmatprep.subr.mxu0 0.0
  %2120 = vmatpush2.msra.mxu0 0.0
  %2121 = vmatprep.subr.mxu0 0.0
  %2122 = vmatpush2.msra.mxu0 0.0
  %2123 = vmatprep.subr.mxu0 0.0
  %2124 = vmatpush2.msra.mxu0 0.0
  %2125 = vmatprep.mubr.f32.mxu0 0.0
  %2126 = vmatmul.mubr.f32.gmra.mxu0 %v2047
  %v2127 = vpop.f32.mrf.mxu0
  %v2128 = vadd.f32 0.0, %v2127
  %v2129 = vpop.f32.mrf.mxu0
  %v2130 = vadd.f32 0.0, %v2129
  %2131 = vdwg.mxu0
  %2132 = vmatprep.subr.mxu0 0.0
  %2133 = vmatpush1.msra.mxu0 0.0
  %2134 = vmatprep.subr.mxu0 0.0
  %2135 = vmatpush1.msra.mxu0 0.0
  %2136 = vmatprep.subr.mxu0 0.0
  %2137 = vmatpush1.msra.mxu0 0.0
  %2138 = vmatprep.subr.mxu0 0.0
  %2139 = vmatpush1.msra.mxu0 0.0
  %2140 = vmatprep.subr.mxu0 0.0
  %2141 = vmatpush1.msra.mxu0 0.0
  %2142 = vmatprep.subr.mxu0 0.0
  %2143 = vmatpush1.msra.mxu0 0.0
  %2144 = vmatprep.subr.mxu0 0.0
  %2145 = vmatpush1.msra.mxu0 0.0
  %2146 = vmatprep.subr.mxu0 0.0
  %2147 = vmatpush1.msra.mxu0 0.0
  %2148 = vmatprep.subr.mxu0 0.0
  %2149 = vmatpush1.msra.mxu0 0.0
  %2150 = vmatprep.subr.mxu0 0.0
  %2151 = vmatpush1.msra.mxu0 0.0
  %2152 = vmatprep.subr.mxu0 0.0
  %2153 = vmatpush1.msra.mxu0 0.0
  %2154 = vmatprep.subr.mxu0 0.0
  %2155 = vmatpush1.msra.mxu0 0.0
  %2156 = vmatprep.subr.mxu0 0.0
  %2157 = vmatpush1.msra.mxu0 0.0
  %2158 = vmatprep.subr.mxu0 0.0
  %2159 = vmatpush1.msra.mxu0 0.0
  %2160 = vmatprep.subr.mxu0 0.0
  %2161 = vmatpush1.msra.mxu0 0.0
  %2162 = vmatprep.subr.mxu0 %v2055
  %2163 = vmatpush1.msra.mxu0 %v2053
  %2164 = vmatprep.subr.mxu0 0.0
  %2165 = vmatpush2.msra.mxu0 0.0
  %2166 = vmatprep.subr.mxu0 0.0
  %2167 = vmatpush2.msra.mxu0 0.0
  %2168 = vmatprep.subr.mxu0 0.0
  %2169 = vmatpush2.msra.mxu0 0.0
  %2170 = vmatprep.subr.mxu0 0.0
  %2171 = vmatpush2.msra.mxu0 0.0
  %2172 = vmatprep.subr.mxu0 0.0
  %2173 = vmatpush2.msra.mxu0 0.0
  %2174 = vmatprep.subr.mxu0 0.0
  %2175 = vmatpush2.msra.mxu0 0.0
  %2176 = vmatprep.subr.mxu0 0.0
  %2177 = vmatpush2.msra.mxu0 0.0
  %2178 = vmatprep.subr.mxu0 0.0
  %2179 = vmatpush2.msra.mxu0 0.0
  %2180 = vmatprep.subr.mxu0 0.0
  %2181 = vmatpush2.msra.mxu0 0.0
  %2182 = vmatprep.subr.mxu0 0.0
  %2183 = vmatpush2.msra.mxu0 0.0
  %2184 = vmatprep.subr.mxu0 0.0
  %2185 = vmatpush2.msra.mxu0 0.0
  %2186 = vmatprep.subr.mxu0 0.0
  %2187 = vmatpush2.msra.mxu0 0.0
  %2188 = vmatprep.subr.mxu0 0.0
  %2189 = vmatpush2.msra.mxu0 0.0
  %2190 = vmatprep.subr.mxu0 0.0
  %2191 = vmatpush2.msra.mxu0 0.0
  %2192 = vmatprep.subr.mxu0 0.0
  %2193 = vmatpush2.msra.mxu0 0.0
  %2194 = vmatprep.subr.mxu0 0.0
  %2195 = vmatpush2.msra.mxu0 0.0
  %2196 = vmatprep.mubr.f32.mxu0 0.0
  %2197 = vmatmul.mubr.f32.gmra.mxu0 %v2047
  %v2198 = vpop.f32.mrf.mxu0
  %v2199 = vadd.f32 0.0, %v2198
  %v2200 = vpop.f32.mrf.mxu0
  %v2201 = vadd.f32 0.0, %v2200
  %2202 = vdwg.mxu0
  %2203 = vmatprep.subr.mxu0 0.0
  %2204 = vmatpush1.msra.mxu0 0.0
  %2205 = vmatprep.subr.mxu0 0.0
  %2206 = vmatpush1.msra.mxu0 0.0
  %2207 = vmatprep.subr.mxu0 0.0
  %2208 = vmatpush1.msra.mxu0 0.0
  %2209 = vmatprep.subr.mxu0 0.0
  %2210 = vmatpush1.msra.mxu0 0.0
  %2211 = vmatprep.subr.mxu0 0.0
  %2212 = vmatpush1.msra.mxu0 0.0
  %2213 = vmatprep.subr.mxu0 0.0
  %2214 = vmatpush1.msra.mxu0 0.0
  %2215 = vmatprep.subr.mxu0 0.0
  %2216 = vmatpush1.msra.mxu0 0.0
  %2217 = vmatprep.subr.mxu0 0.0
  %2218 = vmatpush1.msra.mxu0 0.0
  %2219 = vmatprep.subr.mxu0 0.0
  %2220 = vmatpush1.msra.mxu0 0.0
  %2221 = vmatprep.subr.mxu0 0.0
  %2222 = vmatpush1.msra.mxu0 0.0
  %2223 = vmatprep.subr.mxu0 0.0
  %2224 = vmatpush1.msra.mxu0 0.0
  %2225 = vmatprep.subr.mxu0 0.0
  %2226 = vmatpush1.msra.mxu0 0.0
  %2227 = vmatprep.subr.mxu0 0.0
  %2228 = vmatpush1.msra.mxu0 0.0
  %2229 = vmatprep.subr.mxu0 0.0
  %2230 = vmatpush1.msra.mxu0 0.0
  %2231 = vmatprep.subr.mxu0 0.0
  %2232 = vmatpush1.msra.mxu0 0.0
  %2233 = vmatprep.subr.mxu0 %v2059
  %2234 = vmatpush1.msra.mxu0 %v2057
  %2235 = vmatprep.subr.mxu0 0.0
  %2236 = vmatpush2.msra.mxu0 0.0
  %2237 = vmatprep.subr.mxu0 0.0
  %2238 = vmatpush2.msra.mxu0 0.0
  %2239 = vmatprep.subr.mxu0 0.0
  %2240 = vmatpush2.msra.mxu0 0.0
  %2241 = vmatprep.subr.mxu0 0.0
  %2242 = vmatpush2.msra.mxu0 0.0
  %2243 = vmatprep.subr.mxu0 0.0
  %2244 = vmatpush2.msra.mxu0 0.0
  %2245 = vmatprep.subr.mxu0 0.0
  %2246 = vmatpush2.msra.mxu0 0.0
  %2247 = vmatprep.subr.mxu0 0.0
  %2248 = vmatpush2.msra.mxu0 0.0
  %2249 = vmatprep.subr.mxu0 0.0
  %2250 = vmatpush2.msra.mxu0 0.0
  %2251 = vmatprep.subr.mxu0 0.0
  %2252 = vmatpush2.msra.mxu0 0.0
  %2253 = vmatprep.subr.mxu0 0.0
  %2254 = vmatpush2.msra.mxu0 0.0
  %2255 = vmatprep.subr.mxu0 0.0
  %2256 = vmatpush2.msra.mxu0 0.0
  %2257 = vmatprep.subr.mxu0 0.0
  %2258 = vmatpush2.msra.mxu0 0.0
  %2259 = vmatprep.subr.mxu0 0.0
  %2260 = vmatpush2.msra.mxu0 0.0
  %2261 = vmatprep.subr.mxu0 0.0
  %2262 = vmatpush2.msra.mxu0 0.0
  %2263 = vmatprep.subr.mxu0 0.0
  %2264 = vmatpush2.msra.mxu0 0.0
  %2265 = vmatprep.subr.mxu0 0.0
  %2266 = vmatpush2.msra.mxu0 0.0
  %2267 = vmatprep.mubr.f32.mxu0 0.0
  %2268 = vmatmul.mubr.f32.gmra.mxu0 %v2047
  %v2269 = vpop.f32.mrf.mxu0
  %v2270 = vadd.f32 0.0, %v2269
  %v2271 = vpop.f32.mrf.mxu0
  %v2272 = vadd.f32 0.0, %v2271
  %2273 = vdwg.mxu0
  %v2274 = vadd.f32 %v2020, %v2128
  %v2275 = vadd.f32 %v2021, %v2130
  %v2276 = vadd.f32 %v2022, %v2199
  %v2277 = vadd.f32 %v2023, %v2201
  %v2278 = vadd.f32 %v2024, %v2270
  %v2279 = vadd.f32 %v2025, %v2272
  %2286 = vrot.lane.b32.xlu0 %v2274, 110
  %v2287 = vpop.permute.xlu0 %2286
  %2288 = vrot.lane.b32.xlu0 %v2275, 110
  %v2289 = vpop.permute.xlu0 %2288
  %2290 = vrot.lane.b32.xlu0 %v2276, 110
  %v2291 = vpop.permute.xlu0 %2290
  %2292 = vrot.lane.b32.xlu0 %v2277, 110
  %v2293 = vpop.permute.xlu0 %2292
  %2294 = vrot.lane.b32.xlu0 %v2278, 110
  %v2295 = vpop.permute.xlu0 %2294
  %2296 = vrot.lane.b32.xlu0 %v2279, 110
  %v2297 = vpop.permute.xlu0 %2296
  %v2298 = vsel %vm770, %v2287, %v2289
  %v2299 = vsel %vm770, %v2289, %v2291
  %v2300 = vsel %vm770, %v2291, %v2293
  %v2301 = vsel %vm770, %v2293, %v2295
  %v2302 = vsel %vm770, %v2295, %v2297
  %v2309 = vmax.f32 %v2274, %v2298
  %v2310 = vmax.f32 %v2275, %v2299
  %v2311 = vmax.f32 %v2276, %v2300
  %v2312 = vmax.f32 %v2277, %v2301
  %v2313 = vmax.f32 %v2278, %v2302
  %v2314 = vmax.f32 %v2279, %v2297
  %2321 = vrot.lane.b32.xlu0 %v2309, 127
  %v2322 = vpop.permute.xlu0 %2321
  %2323 = vrot.lane.b32.xlu0 %v2310, 127
  %v2324 = vpop.permute.xlu0 %2323
  %2325 = vrot.lane.b32.xlu0 %v2311, 127
  %v2326 = vpop.permute.xlu0 %2325
  %2327 = vrot.lane.b32.xlu0 %v2312, 127
  %v2328 = vpop.permute.xlu0 %2327
  %2329 = vrot.lane.b32.xlu0 %v2313, 127
  %v2330 = vpop.permute.xlu0 %2329
  %2331 = vrot.lane.b32.xlu0 %v2314, 127
  %v2332 = vpop.permute.xlu0 %2331
  %v2333 = vsel %vm38, %v2322, %v2324
  %v2334 = vsel %vm38, %v2324, %v2326
  %v2335 = vsel %vm38, %v2326, %v2328
  %v2336 = vsel %vm38, %v2328, %v2330
  %v2337 = vsel %vm38, %v2330, %v2332
  %v2344 = vmax.f32 %v2309, %v2333
  %v2345 = vmax.f32 %v2310, %v2334
  %v2346 = vmax.f32 %v2311, %v2335
  %v2347 = vmax.f32 %v2312, %v2336
  %v2348 = vmax.f32 %v2313, %v2337
  %v2349 = vmax.f32 %v2314, %v2332
  %v2350 = vtanh.pop %v2344
  %v2351 = vtanh.pop %v2345
  %v2352 = vtanh.pop %v2346
  %v2353 = vtanh.pop %v2347
  %v2354 = vtanh.pop %v2348
  %v2355 = vtanh.pop %v2349
  %2356 = vst [vmem:[%s2] sm:$0xff] %v2350
  %2357 = vst [vmem:[%s2 + $0x8] sm:$0xff] %v2351
  %2358 = vst [vmem:[%s2 + $0x10] sm:$0xff] %v2352
  %2359 = vst [vmem:[%s2 + $0x18] sm:$0xff] %v2353
  %2360 = vst [vmem:[%s2 + $0x20] sm:$0xff] %v2354
  %vm2361 = vcmask 64512
  %2362 = vst.msk [vmem:[%s2 + $0x28] sm:$0xff] %vm2361, %v2355
  // Predicated region
  $region10: #{encoder_forward.1} parent=0 // pred_check
    _
  $region11: #{encoder_forward.1} parent=0 // pred_check_branch
    %2364 = sbr.rel (0) target = $region13
  $region12: #{encoder_forward.1} parent=0 // pred_region
    _
  $region13: #{encoder_forward.1} parent=0 // pred_fallthru
    _
  // Predicated region
  $region14: #{encoder_forward.1} parent=0 // pred_check
    _
  $region15: #{encoder_forward.1} parent=0 // pred_check_branch
    %2366 = sbr.rel (0) target = $region17
  $region16: #{encoder_forward.1} parent=0 // pred_region
    _
  $region17: #{encoder_forward.1} parent=0 // pred_fallthru
    _

</llo_original>
